<compile_context>
chip_gen: v7x
topology: tpu7x:2x2x1
jax: 0.10.0
libtpu: 0.0.40
codegen_flags: <defaults>
</compile_context>

<pallas_src>
import jax
import jax.numpy as jnp
import numpy as np
from jax.experimental import pallas as pl
from jax.experimental.pallas import tpu as pltpu


def _make_flowstep_kernel(TB, C, H, W, L):
    """Builds the kernel with static shape parameters closed over."""
    Ch = C // 2
    HW = H * W

    def im2col(img, xpad_ref, patches_ref, mask_ref):
        """Build the [9*Cin, H*W] im2col matrix of a [Cin, H*W] image.

        Rows of `img` are channels (sublanes), columns are flattened (y, x)
        (lanes).  The zero-padded flat buffer handles vertical out-of-bounds;
        the per-tap mask additionally kills horizontal wrap-around.
        """
        cin = img.shape[0]
        xpad_ref[...] = jnp.zeros_like(xpad_ref)
        xpad_ref[:, L:L + HW] = img
        for dy in range(3):
            for dx in range(3):
                k = dy * 3 + dx
                s = (dy - 1) * W + (dx - 1)              # flat shift of this tap
                win = xpad_ref[:, L + s:L + s + HW]      # static lane-offset read
                patches_ref[k * cin:(k + 1) * cin, :] = win * mask_ref[k:k + 1, :]

    def kernel(x_ref, wc_ref, bc_ref, w1_ref, b1_ref, w2_ref, b2_ref,
               w3_ref, b3_ref, mask_ref,
               out_ref, ld_ref,
               xpad1_ref, p1_ref, xpad2_ref, p2_ref):
        for t in range(TB):
            x = x_ref[t]                                 # [C, HW], lane-dense

            # fused ActNorm + invertible 1x1 conv:  z = Wc @ x + bc
            z = jnp.dot(wc_ref[...], x,
                        preferred_element_type=jnp.float32) + bc_ref[...]
            x1 = z[:Ch, :]                               # passthrough half
            x2 = z[Ch:, :]

            # conv1: 3x3, Ch -> HID  (single im2col matmul, K = 9*Ch)
            im2col(x1, xpad1_ref, p1_ref, mask_ref)
            h1 = jnp.dot(w1_ref[...], p1_ref[...],
                         preferred_element_type=jnp.float32) + b1_ref[...]
            h1 = jnp.maximum(h1, 0.0)

            # conv2: 1x1, HID -> HID
            h2 = jnp.dot(w2_ref[...], h1,
                         preferred_element_type=jnp.float32) + b2_ref[...]
            h2 = jnp.maximum(h2, 0.0)

            # conv3: 3x3, HID -> C  (single im2col matmul, K = 9*HID,
            # H*W on the MXU N dimension)
            im2col(h2, xpad2_ref, p2_ref, mask_ref)
            h3 = jnp.dot(w3_ref[...], p2_ref[...],
                         preferred_element_type=jnp.float32) + b3_ref[...]

            shift = h3[:Ch, :]
            a = h3[Ch:, :] + 2.0
            # numerically stable sigmoid / log-sigmoid
            e = jnp.exp(-jnp.abs(a))
            r = 1.0 / (1.0 + e)
            sc = jnp.where(a >= 0.0, r, e * r)           # sigmoid(a)
            log_sc = jnp.minimum(a, 0.0) - jnp.log(1.0 + e)

            # lane-dense output stores, no concatenate
            out_ref[t, 0:Ch, :] = x1
            out_ref[t, Ch:C, :] = x2 * sc + shift

            # per-image coupling logdet
            ld3 = jnp.sum(log_sc, axis=1, keepdims=True)     # [Ch, 1] lane reduce
            ld3 = jnp.sum(ld3, axis=0, keepdims=True)        # [1, 1] sublane reduce
            ld_ref[t] = ld3

    return kernel


def flow_step_forward(x_nchw, params):
    x_nchw = x_nchw.astype(jnp.float32)
    B, C, H, W = x_nchw.shape
    Ch = C // 2
    HID = params['b1'].shape[0]
    HW = H * W

    # ---- ActNorm data-dependent init: global stats over (B, H, W) ----
    # TODO(synk): a trained module with stored loc/scale would pass them here.
    mean = jnp.mean(x_nchw, axis=(0, 2, 3))
    std = jnp.std(x_nchw, axis=(0, 2, 3), ddof=1)                # unbiased
    scale_an = 1.0 / (std + 1e-6)
    loc_an = -mean
    ld1 = jnp.sum(jnp.log(jnp.abs(scale_an))) * HW

    # ---- invertible 1x1 conv logdet (no in-kernel slogdet equivalent) ----
    w_inv = params['w_inv'].astype(jnp.float32)                  # [C, C] (out, in)
    ld2 = HW * jnp.linalg.slogdet(w_inv)[1]

    # fold ActNorm into the 1x1 conv (channels-first): z = Wc @ x + bc
    wc = w_inv * scale_an[None, :]                               # [C, C]
    bc = (w_inv @ loc_an).reshape(C, 1)                          # [C, 1]

    # coupling-net weights flattened tap-major to match patch rows k*Cin + c
    w1f = jnp.transpose(params['w1'].astype(jnp.float32),
                        (0, 2, 3, 1)).reshape(HID, 9 * Ch)       # [HID, 9*Ch]
    w3f = jnp.transpose(params['w3'].astype(jnp.float32),
                        (0, 2, 3, 1)).reshape(C, 9 * HID)        # [C, 9*HID]
    w2 = params['w2'].astype(jnp.float32)                        # [HID, HID]
    b1 = params['b1'].astype(jnp.float32).reshape(HID, 1)
    b2 = params['b2'].astype(jnp.float32).reshape(HID, 1)
    b3 = params['b3'].astype(jnp.float32).reshape(C, 1)

    # per-tap validity masks over the flattened (y, x) lane axis
    yy, xx = np.meshgrid(np.arange(H), np.arange(W), indexing='ij')
    taps = []
    for dy in range(3):
        for dx in range(3):
            ok = ((yy + dy - 1 >= 0) & (yy + dy - 1 < H) &
                  (xx + dx - 1 >= 0) & (xx + dx - 1 < W))
            taps.append(ok.reshape(-1))
    mask = jnp.asarray(np.stack(taps, axis=0), dtype=jnp.float32)    # [9, HW]

    # sub-batch per grid step: amortize per-step overhead while leaving >= 4
    # grid steps so both v7x TensorCores still get pipelined work.
    TB = 1
    for cand in (8, 4, 2):
        if B % cand == 0 and B // cand >= 4:
            TB = cand
            break

    L = 128                                      # lane-aligned interior offset
    PADW = ((L + HW + (W + 1) + 127) // 128) * 128   # padded flat buffer width

    x = x_nchw.reshape(B, C, HW)                 # NCHW-native: free reshape

    kernel = _make_flowstep_kernel(TB, C, H, W, L)

    out, ld = pl.pallas_call(
        kernel,
        out_shape=(
            jax.ShapeDtypeStruct((B, C, HW), jnp.float32),
            jax.ShapeDtypeStruct((B, 1, 1), jnp.float32),
        ),
        grid=(B // TB,),
        in_specs=[
            pl.BlockSpec((TB, C, HW), lambda b: (b, 0, 0)),      # x
            pl.BlockSpec((C, C), lambda b: (0, 0)),              # wc
            pl.BlockSpec((C, 1), lambda b: (0, 0)),              # bc
            pl.BlockSpec((HID, 9 * Ch), lambda b: (0, 0)),       # w1f
            pl.BlockSpec((HID, 1), lambda b: (0, 0)),            # b1
            pl.BlockSpec((HID, HID), lambda b: (0, 0)),          # w2
            pl.BlockSpec((HID, 1), lambda b: (0, 0)),            # b2
            pl.BlockSpec((C, 9 * HID), lambda b: (0, 0)),        # w3f
            pl.BlockSpec((C, 1), lambda b: (0, 0)),              # b3
            pl.BlockSpec((9, HW), lambda b: (0, 0)),             # im2col masks
        ],
        out_specs=(
            pl.BlockSpec((TB, C, HW), lambda b: (b, 0, 0)),
            pl.BlockSpec((TB, 1, 1), lambda b: (b, 0, 0)),
        ),
        scratch_shapes=[
            pltpu.VMEM((Ch, PADW), jnp.float32),        # padded flat, conv1 input
            pltpu.VMEM((9 * Ch, HW), jnp.float32),      # im2col patches, conv1
            pltpu.VMEM((HID, PADW), jnp.float32),       # padded flat, conv3 input
            pltpu.VMEM((9 * HID, HW), jnp.float32),     # im2col patches, conv3
        ],
        compiler_params=pltpu.CompilerParams(
            dimension_semantics=("parallel",)),
    )(x, wc, bc, w1f, b1, w2, b2, w3f, b3, mask)

    out_nchw = out.reshape(B, C, H, W)
    logdet = ld.reshape(B) + ld1 + ld2
    return out_nchw, logdet


# ---------------- pure-JAX reference (for correctness check) ----------------
def reference_forward(x, params):
    B, C, H, W = x.shape
    Ch = C // 2
    mean = jnp.mean(x, axis=(0, 2, 3), keepdims=True)
    std = jnp.std(x, axis=(0, 2, 3), keepdims=True, ddof=1)
    loc = -mean
    scale = 1.0 / (std + 1e-6)
    y = x * scale + loc
    ld1 = jnp.sum(jnp.log(jnp.abs(scale))) * H * W

    w = params['w_inv']
    z = jnp.einsum('oc,bchw->bohw', w, y)
    ld2 = H * W * jnp.linalg.slogdet(w)[1]

    x1, x2 = z[:, :Ch], z[:, Ch:]
    dn = ('NCHW', 'OIHW', 'NCHW')
    h = jax.lax.conv_general_dilated(x1, params['w1'], (1, 1), 'SAME',
                                     dimension_numbers=dn)
    h = jnp.maximum(h + params['b1'].reshape(1, -1, 1, 1), 0.0)
    h = jnp.einsum('oi,bihw->bohw', params['w2'], h)
    h = jnp.maximum(h + params['b2'].reshape(1, -1, 1, 1), 0.0)
    h = jax.lax.conv_general_dilated(h, params['w3'], (1, 1), 'SAME',
                                     dimension_numbers=dn)
    h = h + params['b3'].reshape(1, -1, 1, 1)

    shift, sc = h[:, :Ch], jax.nn.sigmoid(h[:, Ch:] + 2.0)
    ld3 = jnp.sum(jnp.log(sc), axis=(1, 2, 3))
    x2n = x2 * sc + shift
    out = jnp.concatenate([x1, x2n], axis=1)
    return out, ld1 + ld2 + ld3


if __name__ == "__main__":
    B, C, H, W, HID = 2, 4, 16, 16, 32
    key = jax.random.PRNGKey(0)
    ks = jax.random.split(key, 8)

    x = jax.random.normal(ks[0], (B, C, H, W), jnp.float32)
    w_inv = jnp.linalg.qr(jax.random.normal(ks[1], (C, C), jnp.float32))[0]
    params = {
        'w_inv': w_inv,                                                  # [C, C]
        'w1': 0.1 * jax.random.normal(ks[2], (HID, C // 2, 3, 3), jnp.float32),
        'b1': 0.1 * jax.random.normal(ks[3], (HID,), jnp.float32),
        'w2': 0.1 * jax.random.normal(ks[4], (HID, HID), jnp.float32),
        'b2': 0.1 * jax.random.normal(ks[5], (HID,), jnp.float32),
        'w3': 0.1 * jax.random.normal(ks[6], (C, HID, 3, 3), jnp.float32),
        'b3': 0.1 * jax.random.normal(ks[7], (C,), jnp.float32),
    }

    out, logdet = flow_step_forward(x, params)
    jax.block_until_ready((out, logdet))

    out_r, logdet_r = reference_forward(x, params)
    np.testing.assert_allclose(np.asarray(out), np.asarray(out_r),
                               rtol=1e-3, atol=1e-3)
    np.testing.assert_allclose(np.asarray(logdet), np.asarray(logdet_r),
                               rtol=1e-3, atol=1e-3)
    print("KERNEL_OK")
</pallas_src>

<mosaic_0001>
module attributes {stable_mosaic.version = 11 : i64} {
  func.func @kernel(%arg0: i32, %arg1: memref<1x4x256xf32, #tpu.memory_space<vmem>>, %arg2: memref<4x4xf32, #tpu.memory_space<vmem>>, %arg3: memref<4x1xf32, #tpu.memory_space<vmem>>, %arg4: memref<32x18xf32, #tpu.memory_space<vmem>>, %arg5: memref<32x1xf32, #tpu.memory_space<vmem>>, %arg6: memref<32x32xf32, #tpu.memory_space<vmem>>, %arg7: memref<32x1xf32, #tpu.memory_space<vmem>>, %arg8: memref<4x288xf32, #tpu.memory_space<vmem>>, %arg9: memref<4x1xf32, #tpu.memory_space<vmem>>, %arg10: memref<9x256xf32, #tpu.memory_space<vmem>>, %arg11: memref<1x4x256xf32, #tpu.memory_space<vmem>>, %arg12: memref<1x1x1xf32, #tpu.memory_space<vmem>>, %arg13: memref<2x512xf32, #tpu.memory_space<vmem>>, %arg14: memref<18x256xf32, #tpu.memory_space<vmem>>, %arg15: memref<32x512xf32, #tpu.memory_space<vmem>>, %arg16: memref<288x256xf32, #tpu.memory_space<vmem>>) attributes {dimension_semantics = [#tpu.dimension_semantics<parallel>], iteration_bounds = array<i64: 2>, scalar_prefetch = 0 : i64, scratch_operands = 4 : i64, tpu.core_type = #tpu.core_type<tc>, window_params = [{transform_indices = @transform_0, window_bounds = array<i64: 1, 4, 256>}, {pipeline_mode = #tpu.pipeline_mode<synchronous>, transform_indices = @transform_1, window_bounds = array<i64: 4, 4>}, {pipeline_mode = #tpu.pipeline_mode<synchronous>, transform_indices = @transform_2, window_bounds = array<i64: 4, 1>}, {pipeline_mode = #tpu.pipeline_mode<synchronous>, transform_indices = @transform_3, window_bounds = array<i64: 32, 18>}, {pipeline_mode = #tpu.pipeline_mode<synchronous>, transform_indices = @transform_4, window_bounds = array<i64: 32, 1>}, {pipeline_mode = #tpu.pipeline_mode<synchronous>, transform_indices = @transform_5, window_bounds = array<i64: 32, 32>}, {pipeline_mode = #tpu.pipeline_mode<synchronous>, transform_indices = @transform_6, window_bounds = array<i64: 32, 1>}, {pipeline_mode = #tpu.pipeline_mode<synchronous>, transform_indices = @transform_7, window_bounds = array<i64: 4, 288>}, {pipeline_mode = #tpu.pipeline_mode<synchronous>, transform_indices = @transform_8, window_bounds = array<i64: 4, 1>}, {pipeline_mode = #tpu.pipeline_mode<synchronous>, transform_indices = @transform_9, window_bounds = array<i64: 9, 256>}, {transform_indices = @transform_10, window_bounds = array<i64: 1, 4, 256>}, {transform_indices = @transform_11, window_bounds = array<i64: 1, 1, 1>}]} {
    %c0 = arith.constant 0 : index
    %c0_0 = arith.constant 0 : index
    %c0_1 = arith.constant 0 : index
    %0 = vector.load %arg1[%c0, %c0_0, %c0_1] : memref<1x4x256xf32, #tpu.memory_space<vmem>>, vector<1x4x256xf32>
    %1 = vector.shape_cast %0 : vector<1x4x256xf32> to vector<4x256xf32>
    %c0_2 = arith.constant 0 : index
    %c0_3 = arith.constant 0 : index
    %2 = vector.load %arg2[%c0_2, %c0_3] : memref<4x4xf32, #tpu.memory_space<vmem>>, vector<4x4xf32>
    %cst = arith.constant dense<0.000000e+00> : vector<4x256xf32>
    %3 = tpu.matmul %2, %1, %cst {dimension_numbers = #tpu.dot_dimension_numbers<[1], [0], [0], [1], [0, 0, 1, 1], [], []>} : vector<4x4xf32>, vector<4x256xf32>, vector<4x256xf32> -> vector<4x256xf32>
    %c0_4 = arith.constant 0 : index
    %c0_5 = arith.constant 0 : index
    %4 = vector.load %arg3[%c0_4, %c0_5] : memref<4x1xf32, #tpu.memory_space<vmem>>, vector<4x1xf32>
    %5 = vector.broadcast %4 : vector<4x1xf32> to vector<4x256xf32>
    %6 = arith.addf %3, %5 : vector<4x256xf32>
    %7 = vector.extract_strided_slice %6 {offsets = [0, 0], sizes = [2, 256], strides = [1, 1]} : vector<4x256xf32> to vector<2x256xf32>
    %8 = vector.extract_strided_slice %6 {offsets = [2, 0], sizes = [2, 256], strides = [1, 1]} : vector<4x256xf32> to vector<2x256xf32>
    %cst_6 = arith.constant 0.000000e+00 : f32
    %9 = vector.broadcast %cst_6 : f32 to vector<2x512xf32>
    %c0_7 = arith.constant 0 : index
    %c0_8 = arith.constant 0 : index
    %10 = vector.load %arg13[%c0_7, %c0_8] : memref<2x512xf32, #tpu.memory_space<vmem>>, vector<2x512xf32>
    tpu.vector_store %arg13[%c0_7, %c0_8], %9 {strides = array<i32>} : memref<2x512xf32, #tpu.memory_space<vmem>>, vector<2x512xf32>,
    %c0_9 = arith.constant 0 : index
    %c128 = arith.constant 128 : index
    %11 = vector.load %arg13[%c0_9, %c128] : memref<2x512xf32, #tpu.memory_space<vmem>>, vector<2x256xf32>
    tpu.vector_store %arg13[%c0_9, %c128], %7 {strides = array<i32>} : memref<2x512xf32, #tpu.memory_space<vmem>>, vector<2x256xf32>,
    %c0_10 = arith.constant 0 : index
    %c111 = arith.constant 111 : index
    %12 = vector.load %arg13[%c0_10, %c111] : memref<2x512xf32, #tpu.memory_space<vmem>>, vector<2x256xf32>
    %c0_11 = arith.constant 0 : index
    %c0_12 = arith.constant 0 : index
    %13 = vector.load %arg10[%c0_11, %c0_12] : memref<9x256xf32, #tpu.memory_space<vmem>>, vector<1x256xf32>
    %14 = vector.broadcast %13 : vector<1x256xf32> to vector<2x256xf32>
    %15 = arith.mulf %12, %14 : vector<2x256xf32>
    %c0_13 = arith.constant 0 : index
    %c0_14 = arith.constant 0 : index
    %16 = vector.load %arg14[%c0_13, %c0_14] : memref<18x256xf32, #tpu.memory_space<vmem>>, vector<2x256xf32>
    tpu.vector_store %arg14[%c0_13, %c0_14], %15 {strides = array<i32>} : memref<18x256xf32, #tpu.memory_space<vmem>>, vector<2x256xf32>,
    %c0_15 = arith.constant 0 : index
    %c112 = arith.constant 112 : index
    %17 = vector.load %arg13[%c0_15, %c112] : memref<2x512xf32, #tpu.memory_space<vmem>>, vector<2x256xf32>
    %c1 = arith.constant 1 : index
    %c0_16 = arith.constant 0 : index
    %18 = vector.load %arg10[%c1, %c0_16] : memref<9x256xf32, #tpu.memory_space<vmem>>, vector<1x256xf32>
    %19 = vector.broadcast %18 : vector<1x256xf32> to vector<2x256xf32>
    %20 = arith.mulf %17, %19 : vector<2x256xf32>
    %c2 = arith.constant 2 : index
    %c0_17 = arith.constant 0 : index
    %21 = vector.load %arg14[%c2, %c0_17] : memref<18x256xf32, #tpu.memory_space<vmem>>, vector<2x256xf32>
    tpu.vector_store %arg14[%c2, %c0_17], %20 {strides = array<i32>} : memref<18x256xf32, #tpu.memory_space<vmem>>, vector<2x256xf32>,
    %c0_18 = arith.constant 0 : index
    %c113 = arith.constant 113 : index
    %22 = vector.load %arg13[%c0_18, %c113] : memref<2x512xf32, #tpu.memory_space<vmem>>, vector<2x256xf32>
    %c2_19 = arith.constant 2 : index
    %c0_20 = arith.constant 0 : index
    %23 = vector.load %arg10[%c2_19, %c0_20] : memref<9x256xf32, #tpu.memory_space<vmem>>, vector<1x256xf32>
    %24 = vector.broadcast %23 : vector<1x256xf32> to vector<2x256xf32>
    %25 = arith.mulf %22, %24 : vector<2x256xf32>
    %c4 = arith.constant 4 : index
    %c0_21 = arith.constant 0 : index
    %26 = vector.load %arg14[%c4, %c0_21] : memref<18x256xf32, #tpu.memory_space<vmem>>, vector<2x256xf32>
    tpu.vector_store %arg14[%c4, %c0_21], %25 {strides = array<i32>} : memref<18x256xf32, #tpu.memory_space<vmem>>, vector<2x256xf32>,
    %c0_22 = arith.constant 0 : index
    %c127 = arith.constant 127 : index
    %27 = vector.load %arg13[%c0_22, %c127] : memref<2x512xf32, #tpu.memory_space<vmem>>, vector<2x256xf32>
    %c3 = arith.constant 3 : index
    %c0_23 = arith.constant 0 : index
    %28 = vector.load %arg10[%c3, %c0_23] : memref<9x256xf32, #tpu.memory_space<vmem>>, vector<1x256xf32>
    %29 = vector.broadcast %28 : vector<1x256xf32> to vector<2x256xf32>
    %30 = arith.mulf %27, %29 : vector<2x256xf32>
    %c6 = arith.constant 6 : index
    %c0_24 = arith.constant 0 : index
    %31 = vector.load %arg14[%c6, %c0_24] : memref<18x256xf32, #tpu.memory_space<vmem>>, vector<2x256xf32>
    tpu.vector_store %arg14[%c6, %c0_24], %30 {strides = array<i32>} : memref<18x256xf32, #tpu.memory_space<vmem>>, vector<2x256xf32>,
    %c0_25 = arith.constant 0 : index
    %c128_26 = arith.constant 128 : index
    %32 = vector.load %arg13[%c0_25, %c128_26] : memref<2x512xf32, #tpu.memory_space<vmem>>, vector<2x256xf32>
    %c4_27 = arith.constant 4 : index
    %c0_28 = arith.constant 0 : index
    %33 = vector.load %arg10[%c4_27, %c0_28] : memref<9x256xf32, #tpu.memory_space<vmem>>, vector<1x256xf32>
    %34 = vector.broadcast %33 : vector<1x256xf32> to vector<2x256xf32>
    %35 = arith.mulf %32, %34 : vector<2x256xf32>
    %c8 = arith.constant 8 : index
    %c0_29 = arith.constant 0 : index
    %36 = vector.load %arg14[%c8, %c0_29] : memref<18x256xf32, #tpu.memory_space<vmem>>, vector<2x256xf32>
    tpu.vector_store %arg14[%c8, %c0_29], %35 {strides = array<i32>} : memref<18x256xf32, #tpu.memory_space<vmem>>, vector<2x256xf32>,
    %c0_30 = arith.constant 0 : index
    %c129 = arith.constant 129 : index
    %37 = vector.load %arg13[%c0_30, %c129] : memref<2x512xf32, #tpu.memory_space<vmem>>, vector<2x256xf32>
    %c5 = arith.constant 5 : index
    %c0_31 = arith.constant 0 : index
    %38 = vector.load %arg10[%c5, %c0_31] : memref<9x256xf32, #tpu.memory_space<vmem>>, vector<1x256xf32>
    %39 = vector.broadcast %38 : vector<1x256xf32> to vector<2x256xf32>
    %40 = arith.mulf %37, %39 : vector<2x256xf32>
    %c10 = arith.constant 10 : index
    %c0_32 = arith.constant 0 : index
    %41 = vector.load %arg14[%c10, %c0_32] : memref<18x256xf32, #tpu.memory_space<vmem>>, vector<2x256xf32>
    tpu.vector_store %arg14[%c10, %c0_32], %40 {strides = array<i32>} : memref<18x256xf32, #tpu.memory_space<vmem>>, vector<2x256xf32>,
    %c0_33 = arith.constant 0 : index
    %c143 = arith.constant 143 : index
    %42 = vector.load %arg13[%c0_33, %c143] : memref<2x512xf32, #tpu.memory_space<vmem>>, vector<2x256xf32>
    %c6_34 = arith.constant 6 : index
    %c0_35 = arith.constant 0 : index
    %43 = vector.load %arg10[%c6_34, %c0_35] : memref<9x256xf32, #tpu.memory_space<vmem>>, vector<1x256xf32>
    %44 = vector.broadcast %43 : vector<1x256xf32> to vector<2x256xf32>
    %45 = arith.mulf %42, %44 : vector<2x256xf32>
    %c12 = arith.constant 12 : index
    %c0_36 = arith.constant 0 : index
    %46 = vector.load %arg14[%c12, %c0_36] : memref<18x256xf32, #tpu.memory_space<vmem>>, vector<2x256xf32>
    tpu.vector_store %arg14[%c12, %c0_36], %45 {strides = array<i32>} : memref<18x256xf32, #tpu.memory_space<vmem>>, vector<2x256xf32>,
    %c0_37 = arith.constant 0 : index
    %c144 = arith.constant 144 : index
    %47 = vector.load %arg13[%c0_37, %c144] : memref<2x512xf32, #tpu.memory_space<vmem>>, vector<2x256xf32>
    %c7 = arith.constant 7 : index
    %c0_38 = arith.constant 0 : index
    %48 = vector.load %arg10[%c7, %c0_38] : memref<9x256xf32, #tpu.memory_space<vmem>>, vector<1x256xf32>
    %49 = vector.broadcast %48 : vector<1x256xf32> to vector<2x256xf32>
    %50 = arith.mulf %47, %49 : vector<2x256xf32>
    %c14 = arith.constant 14 : index
    %c0_39 = arith.constant 0 : index
    %51 = vector.load %arg14[%c14, %c0_39] : memref<18x256xf32, #tpu.memory_space<vmem>>, vector<2x256xf32>
    tpu.vector_store %arg14[%c14, %c0_39], %50 {strides = array<i32>} : memref<18x256xf32, #tpu.memory_space<vmem>>, vector<2x256xf32>,
    %c0_40 = arith.constant 0 : index
    %c145 = arith.constant 145 : index
    %52 = vector.load %arg13[%c0_40, %c145] : memref<2x512xf32, #tpu.memory_space<vmem>>, vector<2x256xf32>
    %c8_41 = arith.constant 8 : index
    %c0_42 = arith.constant 0 : index
    %53 = vector.load %arg10[%c8_41, %c0_42] : memref<9x256xf32, #tpu.memory_space<vmem>>, vector<1x256xf32>
    %54 = vector.broadcast %53 : vector<1x256xf32> to vector<2x256xf32>
    %55 = arith.mulf %52, %54 : vector<2x256xf32>
    %c16 = arith.constant 16 : index
    %c0_43 = arith.constant 0 : index
    %56 = vector.load %arg14[%c16, %c0_43] : memref<18x256xf32, #tpu.memory_space<vmem>>, vector<2x256xf32>
    tpu.vector_store %arg14[%c16, %c0_43], %55 {strides = array<i32>} : memref<18x256xf32, #tpu.memory_space<vmem>>, vector<2x256xf32>,
    %c0_44 = arith.constant 0 : index
    %c0_45 = arith.constant 0 : index
    %57 = vector.load %arg4[%c0_44, %c0_45] : memref<32x18xf32, #tpu.memory_space<vmem>>, vector<32x18xf32>
    %c0_46 = arith.constant 0 : index
    %c0_47 = arith.constant 0 : index
    %58 = vector.load %arg14[%c0_46, %c0_47] : memref<18x256xf32, #tpu.memory_space<vmem>>, vector<18x256xf32>
    %cst_48 = arith.constant dense<0.000000e+00> : vector<32x256xf32>
    %59 = tpu.matmul %57, %58, %cst_48 {dimension_numbers = #tpu.dot_dimension_numbers<[1], [0], [0], [1], [0, 0, 1, 1], [], []>} : vector<32x18xf32>, vector<18x256xf32>, vector<32x256xf32> -> vector<32x256xf32>
    %c0_49 = arith.constant 0 : index
    %c0_50 = arith.constant 0 : index
    %60 = vector.load %arg5[%c0_49, %c0_50] : memref<32x1xf32, #tpu.memory_space<vmem>>, vector<32x1xf32>
    %61 = vector.broadcast %60 : vector<32x1xf32> to vector<32x256xf32>
    %62 = arith.addf %59, %61 : vector<32x256xf32>
    %cst_51 = arith.constant 0.000000e+00 : f32
    %63 = vector.broadcast %cst_51 : f32 to vector<32x256xf32>
    %64 = arith.maximumf %62, %63 : vector<32x256xf32>
    %c0_52 = arith.constant 0 : index
    %c0_53 = arith.constant 0 : index
    %65 = vector.load %arg6[%c0_52, %c0_53] : memref<32x32xf32, #tpu.memory_space<vmem>>, vector<32x32xf32>
    %cst_54 = arith.constant dense<0.000000e+00> : vector<32x256xf32>
    %66 = tpu.matmul %65, %64, %cst_54 {dimension_numbers = #tpu.dot_dimension_numbers<[1], [0], [0], [1], [0, 0, 1, 1], [], []>} : vector<32x32xf32>, vector<32x256xf32>, vector<32x256xf32> -> vector<32x256xf32>
    %c0_55 = arith.constant 0 : index
    %c0_56 = arith.constant 0 : index
    %67 = vector.load %arg7[%c0_55, %c0_56] : memref<32x1xf32, #tpu.memory_space<vmem>>, vector<32x1xf32>
    %68 = vector.broadcast %67 : vector<32x1xf32> to vector<32x256xf32>
    %69 = arith.addf %66, %68 : vector<32x256xf32>
    %cst_57 = arith.constant 0.000000e+00 : f32
    %70 = vector.broadcast %cst_57 : f32 to vector<32x256xf32>
    %71 = arith.maximumf %69, %70 : vector<32x256xf32>
    %cst_58 = arith.constant 0.000000e+00 : f32
    %72 = vector.broadcast %cst_58 : f32 to vector<32x512xf32>
    %c0_59 = arith.constant 0 : index
    %c0_60 = arith.constant 0 : index
    %73 = vector.load %arg15[%c0_59, %c0_60] : memref<32x512xf32, #tpu.memory_space<vmem>>, vector<32x512xf32>
    tpu.vector_store %arg15[%c0_59, %c0_60], %72 {strides = array<i32>} : memref<32x512xf32, #tpu.memory_space<vmem>>, vector<32x512xf32>,
    %c0_61 = arith.constant 0 : index
    %c128_62 = arith.constant 128 : index
    %74 = vector.load %arg15[%c0_61, %c128_62] : memref<32x512xf32, #tpu.memory_space<vmem>>, vector<32x256xf32>
    tpu.vector_store %arg15[%c0_61, %c128_62], %71 {strides = array<i32>} : memref<32x512xf32, #tpu.memory_space<vmem>>, vector<32x256xf32>,
    %c0_63 = arith.constant 0 : index
    %c111_64 = arith.constant 111 : index
    %75 = vector.load %arg15[%c0_63, %c111_64] : memref<32x512xf32, #tpu.memory_space<vmem>>, vector<32x256xf32>
    %c0_65 = arith.constant 0 : index
    %c0_66 = arith.constant 0 : index
    %76 = vector.load %arg10[%c0_65, %c0_66] : memref<9x256xf32, #tpu.memory_space<vmem>>, vector<1x256xf32>
    %77 = vector.broadcast %76 : vector<1x256xf32> to vector<32x256xf32>
    %78 = arith.mulf %75, %77 : vector<32x256xf32>
    %c0_67 = arith.constant 0 : index
    %c0_68 = arith.constant 0 : index
    %79 = vector.load %arg16[%c0_67, %c0_68] : memref<288x256xf32, #tpu.memory_space<vmem>>, vector<32x256xf32>
    tpu.vector_store %arg16[%c0_67, %c0_68], %78 {strides = array<i32>} : memref<288x256xf32, #tpu.memory_space<vmem>>, vector<32x256xf32>,
    %c0_69 = arith.constant 0 : index
    %c112_70 = arith.constant 112 : index
    %80 = vector.load %arg15[%c0_69, %c112_70] : memref<32x512xf32, #tpu.memory_space<vmem>>, vector<32x256xf32>
    %c1_71 = arith.constant 1 : index
    %c0_72 = arith.constant 0 : index
    %81 = vector.load %arg10[%c1_71, %c0_72] : memref<9x256xf32, #tpu.memory_space<vmem>>, vector<1x256xf32>
    %82 = vector.broadcast %81 : vector<1x256xf32> to vector<32x256xf32>
    %83 = arith.mulf %80, %82 : vector<32x256xf32>
    %c32 = arith.constant 32 : index
    %c0_73 = arith.constant 0 : index
    %84 = vector.load %arg16[%c32, %c0_73] : memref<288x256xf32, #tpu.memory_space<vmem>>, vector<32x256xf32>
    tpu.vector_store %arg16[%c32, %c0_73], %83 {strides = array<i32>} : memref<288x256xf32, #tpu.memory_space<vmem>>, vector<32x256xf32>,
    %c0_74 = arith.constant 0 : index
    %c113_75 = arith.constant 113 : index
    %85 = vector.load %arg15[%c0_74, %c113_75] : memref<32x512xf32, #tpu.memory_space<vmem>>, vector<32x256xf32>
    %c2_76 = arith.constant 2 : index
    %c0_77 = arith.constant 0 : index
    %86 = vector.load %arg10[%c2_76, %c0_77] : memref<9x256xf32, #tpu.memory_space<vmem>>, vector<1x256xf32>
    %87 = vector.broadcast %86 : vector<1x256xf32> to vector<32x256xf32>
    %88 = arith.mulf %85, %87 : vector<32x256xf32>
    %c64 = arith.constant 64 : index
    %c0_78 = arith.constant 0 : index
    %89 = vector.load %arg16[%c64, %c0_78] : memref<288x256xf32, #tpu.memory_space<vmem>>, vector<32x256xf32>
    tpu.vector_store %arg16[%c64, %c0_78], %88 {strides = array<i32>} : memref<288x256xf32, #tpu.memory_space<vmem>>, vector<32x256xf32>,
    %c0_79 = arith.constant 0 : index
    %c127_80 = arith.constant 127 : index
    %90 = vector.load %arg15[%c0_79, %c127_80] : memref<32x512xf32, #tpu.memory_space<vmem>>, vector<32x256xf32>
    %c3_81 = arith.constant 3 : index
    %c0_82 = arith.constant 0 : index
    %91 = vector.load %arg10[%c3_81, %c0_82] : memref<9x256xf32, #tpu.memory_space<vmem>>, vector<1x256xf32>
    %92 = vector.broadcast %91 : vector<1x256xf32> to vector<32x256xf32>
    %93 = arith.mulf %90, %92 : vector<32x256xf32>
    %c96 = arith.constant 96 : index
    %c0_83 = arith.constant 0 : index
    %94 = vector.load %arg16[%c96, %c0_83] : memref<288x256xf32, #tpu.memory_space<vmem>>, vector<32x256xf32>
    tpu.vector_store %arg16[%c96, %c0_83], %93 {strides = array<i32>} : memref<288x256xf32, #tpu.memory_space<vmem>>, vector<32x256xf32>,
    %c0_84 = arith.constant 0 : index
    %c128_85 = arith.constant 128 : index
    %95 = vector.load %arg15[%c0_84, %c128_85] : memref<32x512xf32, #tpu.memory_space<vmem>>, vector<32x256xf32>
    %c4_86 = arith.constant 4 : index
    %c0_87 = arith.constant 0 : index
    %96 = vector.load %arg10[%c4_86, %c0_87] : memref<9x256xf32, #tpu.memory_space<vmem>>, vector<1x256xf32>
    %97 = vector.broadcast %96 : vector<1x256xf32> to vector<32x256xf32>
    %98 = arith.mulf %95, %97 : vector<32x256xf32>
    %c128_88 = arith.constant 128 : index
    %c0_89 = arith.constant 0 : index
    %99 = vector.load %arg16[%c128_88, %c0_89] : memref<288x256xf32, #tpu.memory_space<vmem>>, vector<32x256xf32>
    tpu.vector_store %arg16[%c128_88, %c0_89], %98 {strides = array<i32>} : memref<288x256xf32, #tpu.memory_space<vmem>>, vector<32x256xf32>,
    %c0_90 = arith.constant 0 : index
    %c129_91 = arith.constant 129 : index
    %100 = vector.load %arg15[%c0_90, %c129_91] : memref<32x512xf32, #tpu.memory_space<vmem>>, vector<32x256xf32>
    %c5_92 = arith.constant 5 : index
    %c0_93 = arith.constant 0 : index
    %101 = vector.load %arg10[%c5_92, %c0_93] : memref<9x256xf32, #tpu.memory_space<vmem>>, vector<1x256xf32>
    %102 = vector.broadcast %101 : vector<1x256xf32> to vector<32x256xf32>
    %103 = arith.mulf %100, %102 : vector<32x256xf32>
    %c160 = arith.constant 160 : index
    %c0_94 = arith.constant 0 : index
    %104 = vector.load %arg16[%c160, %c0_94] : memref<288x256xf32, #tpu.memory_space<vmem>>, vector<32x256xf32>
    tpu.vector_store %arg16[%c160, %c0_94], %103 {strides = array<i32>} : memref<288x256xf32, #tpu.memory_space<vmem>>, vector<32x256xf32>,
    %c0_95 = arith.constant 0 : index
    %c143_96 = arith.constant 143 : index
    %105 = vector.load %arg15[%c0_95, %c143_96] : memref<32x512xf32, #tpu.memory_space<vmem>>, vector<32x256xf32>
    %c6_97 = arith.constant 6 : index
    %c0_98 = arith.constant 0 : index
    %106 = vector.load %arg10[%c6_97, %c0_98] : memref<9x256xf32, #tpu.memory_space<vmem>>, vector<1x256xf32>
    %107 = vector.broadcast %106 : vector<1x256xf32> to vector<32x256xf32>
    %108 = arith.mulf %105, %107 : vector<32x256xf32>
    %c192 = arith.constant 192 : index
    %c0_99 = arith.constant 0 : index
    %109 = vector.load %arg16[%c192, %c0_99] : memref<288x256xf32, #tpu.memory_space<vmem>>, vector<32x256xf32>
    tpu.vector_store %arg16[%c192, %c0_99], %108 {strides = array<i32>} : memref<288x256xf32, #tpu.memory_space<vmem>>, vector<32x256xf32>,
    %c0_100 = arith.constant 0 : index
    %c144_101 = arith.constant 144 : index
    %110 = vector.load %arg15[%c0_100, %c144_101] : memref<32x512xf32, #tpu.memory_space<vmem>>, vector<32x256xf32>
    %c7_102 = arith.constant 7 : index
    %c0_103 = arith.constant 0 : index
    %111 = vector.load %arg10[%c7_102, %c0_103] : memref<9x256xf32, #tpu.memory_space<vmem>>, vector<1x256xf32>
    %112 = vector.broadcast %111 : vector<1x256xf32> to vector<32x256xf32>
    %113 = arith.mulf %110, %112 : vector<32x256xf32>
    %c224 = arith.constant 224 : index
    %c0_104 = arith.constant 0 : index
    %114 = vector.load %arg16[%c224, %c0_104] : memref<288x256xf32, #tpu.memory_space<vmem>>, vector<32x256xf32>
    tpu.vector_store %arg16[%c224, %c0_104], %113 {strides = array<i32>} : memref<288x256xf32, #tpu.memory_space<vmem>>, vector<32x256xf32>,
    %c0_105 = arith.constant 0 : index
    %c145_106 = arith.constant 145 : index
    %115 = vector.load %arg15[%c0_105, %c145_106] : memref<32x512xf32, #tpu.memory_space<vmem>>, vector<32x256xf32>
    %c8_107 = arith.constant 8 : index
    %c0_108 = arith.constant 0 : index
    %116 = vector.load %arg10[%c8_107, %c0_108] : memref<9x256xf32, #tpu.memory_space<vmem>>, vector<1x256xf32>
    %117 = vector.broadcast %116 : vector<1x256xf32> to vector<32x256xf32>
    %118 = arith.mulf %115, %117 : vector<32x256xf32>
    %c256 = arith.constant 256 : index
    %c0_109 = arith.constant 0 : index
    %119 = vector.load %arg16[%c256, %c0_109] : memref<288x256xf32, #tpu.memory_space<vmem>>, vector<32x256xf32>
    tpu.vector_store %arg16[%c256, %c0_109], %118 {strides = array<i32>} : memref<288x256xf32, #tpu.memory_space<vmem>>, vector<32x256xf32>,
    %c0_110 = arith.constant 0 : index
    %c0_111 = arith.constant 0 : index
    %120 = vector.load %arg8[%c0_110, %c0_111] : memref<4x288xf32, #tpu.memory_space<vmem>>, vector<4x288xf32>
    %c0_112 = arith.constant 0 : index
    %c0_113 = arith.constant 0 : index
    %121 = vector.load %arg16[%c0_112, %c0_113] : memref<288x256xf32, #tpu.memory_space<vmem>>, vector<288x256xf32>
    %cst_114 = arith.constant dense<0.000000e+00> : vector<4x256xf32>
    %122 = tpu.matmul %120, %121, %cst_114 {dimension_numbers = #tpu.dot_dimension_numbers<[1], [0], [0], [1], [0, 0, 1, 1], [], []>} : vector<4x288xf32>, vector<288x256xf32>, vector<4x256xf32> -> vector<4x256xf32>
    %c0_115 = arith.constant 0 : index
    %c0_116 = arith.constant 0 : index
    %123 = vector.load %arg9[%c0_115, %c0_116] : memref<4x1xf32, #tpu.memory_space<vmem>>, vector<4x1xf32>
    %124 = vector.broadcast %123 : vector<4x1xf32> to vector<4x256xf32>
    %125 = arith.addf %122, %124 : vector<4x256xf32>
    %126 = vector.extract_strided_slice %125 {offsets = [0, 0], sizes = [2, 256], strides = [1, 1]} : vector<4x256xf32> to vector<2x256xf32>
    %127 = vector.extract_strided_slice %125 {offsets = [2, 0], sizes = [2, 256], strides = [1, 1]} : vector<4x256xf32> to vector<2x256xf32>
    %cst_117 = arith.constant 2.000000e+00 : f32
    %128 = vector.broadcast %cst_117 : f32 to vector<2x256xf32>
    %129 = arith.addf %127, %128 : vector<2x256xf32>
    %130 = math.absf %129 : vector<2x256xf32>
    %cst_118 = arith.constant 0.000000e+00 : f32
    %131 = vector.broadcast %cst_118 : f32 to vector<2x256xf32>
    %132 = arith.subf %131, %130 : vector<2x256xf32>
    %133 = math.exp %132 : vector<2x256xf32>
    %cst_119 = arith.constant 1.000000e+00 : f32
    %134 = vector.broadcast %cst_119 : f32 to vector<2x256xf32>
    %135 = arith.addf %134, %133 : vector<2x256xf32>
    %cst_120 = arith.constant 1.000000e+00 : f32
    %136 = vector.broadcast %cst_120 : f32 to vector<2x256xf32>
    %137 = arith.divf %136, %135 : vector<2x256xf32>
    %cst_121 = arith.constant 0.000000e+00 : f32
    %138 = vector.broadcast %cst_121 : f32 to vector<2x256xf32>
    %139 = arith.cmpf oge, %129, %138 : vector<2x256xf32>
    %140 = arith.mulf %133, %137 : vector<2x256xf32>
    %141 = arith.select %139, %137, %140 : vector<2x256xi1>, vector<2x256xf32>
    %cst_122 = arith.constant 0.000000e+00 : f32
    %142 = vector.broadcast %cst_122 : f32 to vector<2x256xf32>
    %143 = arith.minimumf %129, %142 : vector<2x256xf32>
    %cst_123 = arith.constant 1.000000e+00 : f32
    %144 = vector.broadcast %cst_123 : f32 to vector<2x256xf32>
    %145 = arith.addf %144, %133 : vector<2x256xf32>
    %146 = math.log %145 : vector<2x256xf32>
    %147 = arith.subf %143, %146 : vector<2x256xf32>
    %c0_124 = arith.constant 0 : index
    %c0_125 = arith.constant 0 : index
    %c0_126 = arith.constant 0 : index
    %148 = vector.load %arg11[%c0_124, %c0_125, %c0_126] : memref<1x4x256xf32, #tpu.memory_space<vmem>>, vector<1x2x256xf32>
    %149 = vector.shape_cast %148 : vector<1x2x256xf32> to vector<2x256xf32>
    %150 = vector.shape_cast %7 : vector<2x256xf32> to vector<1x2x256xf32>
    tpu.vector_store %arg11[%c0_124, %c0_125, %c0_126], %150 {strides = array<i32>} : memref<1x4x256xf32, #tpu.memory_space<vmem>>, vector<1x2x256xf32>,
    %151 = arith.mulf %8, %141 : vector<2x256xf32>
    %152 = arith.addf %151, %126 : vector<2x256xf32>
    %c0_127 = arith.constant 0 : index
    %c2_128 = arith.constant 2 : index
    %c0_129 = arith.constant 0 : index
    %153 = vector.load %arg11[%c0_127, %c2_128, %c0_129] : memref<1x4x256xf32, #tpu.memory_space<vmem>>, vector<1x2x256xf32>
    %154 = vector.shape_cast %153 : vector<1x2x256xf32> to vector<2x256xf32>
    %155 = vector.shape_cast %152 : vector<2x256xf32> to vector<1x2x256xf32>
    tpu.vector_store %arg11[%c0_127, %c2_128, %c0_129], %155 {strides = array<i32>} : memref<1x4x256xf32, #tpu.memory_space<vmem>>, vector<1x2x256xf32>,
    %cst_130 = arith.constant dense<0.000000e+00> : vector<2xf32>
    %156 = vector.multi_reduction <add>, %147, %cst_130 [1] : vector<2x256xf32> to vector<2xf32>
    %157 = vector.shape_cast %156 : vector<2xf32> to vector<2x1xf32>
    %cst_131 = arith.constant dense<0.000000e+00> : vector<1xf32>
    %158 = vector.multi_reduction <add>, %157, %cst_131 [0] : vector<2x1xf32> to vector<1xf32>
    %159 = vector.shape_cast %158 : vector<1xf32> to vector<1x1xf32>
    %c0_132 = arith.constant 0 : index
    %c0_133 = arith.constant 0 : index
    %c0_134 = arith.constant 0 : index
    %160 = vector.load %arg12[%c0_132, %c0_133, %c0_134] : memref<1x1x1xf32, #tpu.memory_space<vmem>>, vector<1x1x1xf32>
    %161 = vector.shape_cast %160 : vector<1x1x1xf32> to vector<1x1xf32>
    %162 = vector.shape_cast %159 : vector<1x1xf32> to vector<1x1x1xf32>
    tpu.vector_store %arg12[%c0_132, %c0_133, %c0_134], %162 {strides = array<i32>} : memref<1x1x1xf32, #tpu.memory_space<vmem>>, vector<1x1x1xf32>,
    return
  }
  func.func @transform_0(%arg0: i32) -> (i32, i32, i32) {
    %c0_i32 = arith.constant 0 : i32
    %c0_i32_0 = arith.constant 0 : i32
    %c0_i32_1 = arith.constant 0 : i32
    return %arg0, %c0_i32, %c0_i32_0 : i32, i32, i32
  }
  func.func @transform_1(%arg0: i32) -> (i32, i32) {
    %c0_i32 = arith.constant 0 : i32
    %c0_i32_0 = arith.constant 0 : i32
    %c0_i32_1 = arith.constant 0 : i32
    return %c0_i32, %c0_i32_0 : i32, i32
  }
  func.func @transform_2(%arg0: i32) -> (i32, i32) {
    %c0_i32 = arith.constant 0 : i32
    %c0_i32_0 = arith.constant 0 : i32
    %c0_i32_1 = arith.constant 0 : i32
    return %c0_i32, %c0_i32_0 : i32, i32
  }
  func.func @transform_3(%arg0: i32) -> (i32, i32) {
    %c0_i32 = arith.constant 0 : i32
    %c0_i32_0 = arith.constant 0 : i32
    %c0_i32_1 = arith.constant 0 : i32
    return %c0_i32, %c0_i32_0 : i32, i32
  }
  func.func @transform_4(%arg0: i32) -> (i32, i32) {
    %c0_i32 = arith.constant 0 : i32
    %c0_i32_0 = arith.constant 0 : i32
    %c0_i32_1 = arith.constant 0 : i32
    return %c0_i32, %c0_i32_0 : i32, i32
  }
  func.func @transform_5(%arg0: i32) -> (i32, i32) {
    %c0_i32 = arith.constant 0 : i32
    %c0_i32_0 = arith.constant 0 : i32
    %c0_i32_1 = arith.constant 0 : i32
    return %c0_i32, %c0_i32_0 : i32, i32
  }
  func.func @transform_6(%arg0: i32) -> (i32, i32) {
    %c0_i32 = arith.constant 0 : i32
    %c0_i32_0 = arith.constant 0 : i32
    %c0_i32_1 = arith.constant 0 : i32
    return %c0_i32, %c0_i32_0 : i32, i32
  }
  func.func @transform_7(%arg0: i32) -> (i32, i32) {
    %c0_i32 = arith.constant 0 : i32
    %c0_i32_0 = arith.constant 0 : i32
    %c0_i32_1 = arith.constant 0 : i32
    return %c0_i32, %c0_i32_0 : i32, i32
  }
  func.func @transform_8(%arg0: i32) -> (i32, i32) {
    %c0_i32 = arith.constant 0 : i32
    %c0_i32_0 = arith.constant 0 : i32
    %c0_i32_1 = arith.constant 0 : i32
    return %c0_i32, %c0_i32_0 : i32, i32
  }
  func.func @transform_9(%arg0: i32) -> (i32, i32) {
    %c0_i32 = arith.constant 0 : i32
    %c0_i32_0 = arith.constant 0 : i32
    %c0_i32_1 = arith.constant 0 : i32
    return %c0_i32, %c0_i32_0 : i32, i32
  }
  func.func @transform_10(%arg0: i32) -> (i32, i32, i32) {
    %c0_i32 = arith.constant 0 : i32
    %c0_i32_0 = arith.constant 0 : i32
    %c0_i32_1 = arith.constant 0 : i32
    return %arg0, %c0_i32, %c0_i32_0 : i32, i32, i32
  }
  func.func @transform_11(%arg0: i32) -> (i32, i32, i32) {
    %c0_i32 = arith.constant 0 : i32
    %c0_i32_0 = arith.constant 0 : i32
    %c0_i32_1 = arith.constant 0 : i32
    return %arg0, %c0_i32, %c0_i32_0 : i32, i32, i32
  }
}

</mosaic_0001>

<llo_original>
// kernel: tpu_custom_call.1
$region0: #{tpu_custom_call.1}
  #allocation0 [shape = 'u32[]', space=smem, size = 0x4, offset = 0x4, fixed_abs, tag = 'smem constant byte address 0x4 - core index']
  #allocation1 [shape = 'u32[144,128]{1,0:T(1,128)}', space=vmem, size = 0x12000, scoped, tag = 'internal scratch']
  #allocation2 [shape = 'f32[2,512]{1,0:T(2,128)}', space=vmem, size = 0x1000, scoped, tag = 'scratch operand']
  #allocation3 [shape = 'f32[18,256]{1,0:T(8,128)}', space=vmem, size = 0x6000, scoped, tag = 'scratch operand']
  #allocation4 [shape = 'f32[32,512]{1,0:T(8,128)}', space=vmem, size = 0x10000, scoped, tag = 'scratch operand']
  #allocation5 [shape = 'f32[288,256]{1,0:T(8,128)}', space=vmem, size = 0x48000, scoped, tag = 'scratch operand']
  %s0 = inlined_call_operand.vmem [shape: f32[2,4,256], index: 0, kind: input, shape index: {}]
  %s1 = inlined_call_operand.vmem [shape: f32[4,4], index: 1, kind: input, shape index: {}]
  %s2 = inlined_call_operand.vmem [shape: f32[4,1], index: 2, kind: input, shape index: {}]
  %s3 = inlined_call_operand.vmem [shape: f32[32,18], index: 3, kind: input, shape index: {}]
  %s4 = inlined_call_operand.vmem [shape: f32[32,1], index: 4, kind: input, shape index: {}]
  %s5 = inlined_call_operand.vmem [shape: f32[32,32], index: 5, kind: input, shape index: {}]
  %s6 = inlined_call_operand.vmem [shape: f32[32,1], index: 6, kind: input, shape index: {}]
  %s7 = inlined_call_operand.vmem [shape: f32[4,288], index: 7, kind: input, shape index: {}]
  %s8 = inlined_call_operand.vmem [shape: f32[4,1], index: 8, kind: input, shape index: {}]
  %s9 = inlined_call_operand.vmem [shape: f32[9,256], index: 9, kind: input, shape index: {}]
  %s10 = inlined_call_operand.hbm [shape: f32[2,4,256], index: 10, kind: output, shape index: {0}]
  %s11 = inlined_call_operand.vmem [shape: f32[2,1,1], index: 11, kind: output, shape index: {1}]
  %12 = xla_tuple %s10, %s11
  %s13 = sld [smem:[#allocation0]]
  $region81: #{tpu_custom_call.1} parent=0
    _
  %s15 = ssub.s32 1, %s13
  %s16 = scalar_select 0, %s15, %s13
  $region1: #{tpu_custom_call.1} parent=0
    #allocation6 [shape = 'u8[8192]{0}', space=vmem, size = 0x2000, scoped, tag = 'output window, operand 0']
    #allocation7 [shape = 's32[2]{0}', space=sflag, size = 0x8, scoped, tag = 'scoped memory for tpu_custom_call.1']
    %17 = vsyncpa [#allocation7], 0
    %s18 = scalar_lea.sflag [#allocation7], 1
    %19 = vsyncpa %s18, 0
    loop: start=0, step=1, limit=4
    $region2: #{tpu_custom_call.1} parent=1 // loop_pre_header
      _
    $region3: #{tpu_custom_call.1} parent=1 // loop_header
      %s21 = sphi 0, %s25
      %p22 = scmp.ge.s32.totalorder %s21, 4
      %s31 = sphi 0, %s33
      %s34 = sphi 0, %s31
      %s35 = sphi 0, %s34
      %s51 = sphi 0, %s35
      %s55 = sphi 0, %s55
      %s57 = sphi 0, %s55
      %s58 = sphi 0, %s57
      %s72 = sphi 0, %s58
      %s76 = sphi 0, %s76
      %s78 = sphi 0, %s76
      %s79 = sphi 0, %s78
      %s93 = sphi 0, %s79
      %s97 = sphi 0, %s97
      %s99 = sphi 0, %s97
      %s100 = sphi 0, %s99
      %s114 = sphi 0, %s100
      %s118 = sphi 0, %s118
      %s120 = sphi 0, %s118
      %s121 = sphi 0, %s120
      %s135 = sphi 0, %s121
      %s139 = sphi 0, %s139
      %s141 = sphi 0, %s139
      %s142 = sphi 0, %s141
      %s156 = sphi 0, %s142
      %s160 = sphi 0, %s160
      %s162 = sphi 0, %s160
      %s163 = sphi 0, %s162
      %s177 = sphi 0, %s163
      %s181 = sphi 0, %s181
      %s183 = sphi 0, %s181
      %s184 = sphi 0, %s183
      %s198 = sphi 0, %s184
      %s202 = sphi 0, %s202
      %s204 = sphi 0, %s202
      %s205 = sphi 0, %s204
      %s219 = sphi 0, %s205
      %s223 = sphi 0, %s223
      %s225 = sphi 0, %s223
      %s226 = sphi 0, %s225
      %s240 = sphi 0, %s226
      %s246 = sphi 0, %s248
      %s249 = sphi 0, %s246
      %s250 = sphi 0, %s249
      %s266 = sphi 0, %s250
      %s272 = sphi 0, %s274
      %s275 = sphi 0, %s272
      %s276 = sphi 0, %s275
      %s292 = sphi 0, %s276
    $region4: #{tpu_custom_call.1} parent=1 // loop_header_branch
      %24 = sbr.rel (%p22) target = $region8
    $region5: #{tpu_custom_call.1} parent=1 // loop_body
      %s26 = ssub.s32 %s21, 1
      %s27 = ssub.s32 %s21, 2
      %s28 = sadd.s32 %s21, 1
      %s29 = ssub.s32 %s21, %s28
      %p30 = scmp.eq.s32.totalorder %s29, 0
      %s32 = sadd.s32 %s31, 1
      %s33 = scalar_select %p30, %s31, %s32
      %p36 = pneg %p30
      %p37 = scmp.eq.s32.totalorder %s21, 1
      %p38 = por %p36, %p37
      %p39 = scmp.ne.s32.totalorder %s31, %s34
      %p40 = scmp.eq.s32.totalorder %s21, 0
      %p41 = por %p39, %p40
      %p42 = scmp.ne.s32.totalorder %s31, %s34
      %p43 = scmp.eq.s32.totalorder %s26, 1
      %p44 = por %p42, %p43
      %p45 = scmp.ne.s32.totalorder %s34, %s35
      %p46 = scmp.eq.s32.totalorder %s26, 0
      %p47 = por %p45, %p46
      %p48 = scmp.ne.s32.totalorder %s34, %s35
      %p49 = scmp.eq.s32.totalorder %s27, 1
      %p50 = por %p48, %p49
      %p52 = scmp.ne.s32.totalorder %s35, %s51
      %p53 = scmp.eq.s32.totalorder %s27, 0
      %p54 = por %p52, %p53
      %s56 = sadd.s32 %s55, 1
      %p59 = scmp.eq.s32.totalorder %s21, 1
      %p60 = scmp.ne.s32.totalorder %s55, %s57
      %p61 = scmp.eq.s32.totalorder %s21, 0
      %p62 = por %p60, %p61
      %p63 = scmp.ne.s32.totalorder %s55, %s57
      %p64 = scmp.eq.s32.totalorder %s26, 1
      %p65 = por %p63, %p64
      %p66 = scmp.ne.s32.totalorder %s57, %s58
      %p67 = scmp.eq.s32.totalorder %s26, 0
      %p68 = por %p66, %p67
      %p69 = scmp.ne.s32.totalorder %s57, %s58
      %p70 = scmp.eq.s32.totalorder %s27, 1
      %p71 = por %p69, %p70
      %p73 = scmp.ne.s32.totalorder %s58, %s72
      %p74 = scmp.eq.s32.totalorder %s27, 0
      %p75 = por %p73, %p74
      %s77 = sadd.s32 %s76, 1
      %p80 = scmp.eq.s32.totalorder %s21, 1
      %p81 = scmp.ne.s32.totalorder %s76, %s78
      %p82 = scmp.eq.s32.totalorder %s21, 0
      %p83 = por %p81, %p82
      %p84 = scmp.ne.s32.totalorder %s76, %s78
      %p85 = scmp.eq.s32.totalorder %s26, 1
      %p86 = por %p84, %p85
      %p87 = scmp.ne.s32.totalorder %s78, %s79
      %p88 = scmp.eq.s32.totalorder %s26, 0
      %p89 = por %p87, %p88
      %p90 = scmp.ne.s32.totalorder %s78, %s79
      %p91 = scmp.eq.s32.totalorder %s27, 1
      %p92 = por %p90, %p91
      %p94 = scmp.ne.s32.totalorder %s79, %s93
      %p95 = scmp.eq.s32.totalorder %s27, 0
      %p96 = por %p94, %p95
      %s98 = sadd.s32 %s97, 1
      %p101 = scmp.eq.s32.totalorder %s21, 1
      %p102 = scmp.ne.s32.totalorder %s97, %s99
      %p103 = scmp.eq.s32.totalorder %s21, 0
      %p104 = por %p102, %p103
      %p105 = scmp.ne.s32.totalorder %s97, %s99
      %p106 = scmp.eq.s32.totalorder %s26, 1
      %p107 = por %p105, %p106
      %p108 = scmp.ne.s32.totalorder %s99, %s100
      %p109 = scmp.eq.s32.totalorder %s26, 0
      %p110 = por %p108, %p109
      %p111 = scmp.ne.s32.totalorder %s99, %s100
      %p112 = scmp.eq.s32.totalorder %s27, 1
      %p113 = por %p111, %p112
      %p115 = scmp.ne.s32.totalorder %s100, %s114
      %p116 = scmp.eq.s32.totalorder %s27, 0
      %p117 = por %p115, %p116
      %s119 = sadd.s32 %s118, 1
      %p122 = scmp.eq.s32.totalorder %s21, 1
      %p123 = scmp.ne.s32.totalorder %s118, %s120
      %p124 = scmp.eq.s32.totalorder %s21, 0
      %p125 = por %p123, %p124
      %p126 = scmp.ne.s32.totalorder %s118, %s120
      %p127 = scmp.eq.s32.totalorder %s26, 1
      %p128 = por %p126, %p127
      %p129 = scmp.ne.s32.totalorder %s120, %s121
      %p130 = scmp.eq.s32.totalorder %s26, 0
      %p131 = por %p129, %p130
      %p132 = scmp.ne.s32.totalorder %s120, %s121
      %p133 = scmp.eq.s32.totalorder %s27, 1
      %p134 = por %p132, %p133
      %p136 = scmp.ne.s32.totalorder %s121, %s135
      %p137 = scmp.eq.s32.totalorder %s27, 0
      %p138 = por %p136, %p137
      %s140 = sadd.s32 %s139, 1
      %p143 = scmp.eq.s32.totalorder %s21, 1
      %p144 = scmp.ne.s32.totalorder %s139, %s141
      %p145 = scmp.eq.s32.totalorder %s21, 0
      %p146 = por %p144, %p145
      %p147 = scmp.ne.s32.totalorder %s139, %s141
      %p148 = scmp.eq.s32.totalorder %s26, 1
      %p149 = por %p147, %p148
      %p150 = scmp.ne.s32.totalorder %s141, %s142
      %p151 = scmp.eq.s32.totalorder %s26, 0
      %p152 = por %p150, %p151
      %p153 = scmp.ne.s32.totalorder %s141, %s142
      %p154 = scmp.eq.s32.totalorder %s27, 1
      %p155 = por %p153, %p154
      %p157 = scmp.ne.s32.totalorder %s142, %s156
      %p158 = scmp.eq.s32.totalorder %s27, 0
      %p159 = por %p157, %p158
      %s161 = sadd.s32 %s160, 1
      %p164 = scmp.eq.s32.totalorder %s21, 1
      %p165 = scmp.ne.s32.totalorder %s160, %s162
      %p166 = scmp.eq.s32.totalorder %s21, 0
      %p167 = por %p165, %p166
      %p168 = scmp.ne.s32.totalorder %s160, %s162
      %p169 = scmp.eq.s32.totalorder %s26, 1
      %p170 = por %p168, %p169
      %p171 = scmp.ne.s32.totalorder %s162, %s163
      %p172 = scmp.eq.s32.totalorder %s26, 0
      %p173 = por %p171, %p172
      %p174 = scmp.ne.s32.totalorder %s162, %s163
      %p175 = scmp.eq.s32.totalorder %s27, 1
      %p176 = por %p174, %p175
      %p178 = scmp.ne.s32.totalorder %s163, %s177
      %p179 = scmp.eq.s32.totalorder %s27, 0
      %p180 = por %p178, %p179
      %s182 = sadd.s32 %s181, 1
      %p185 = scmp.eq.s32.totalorder %s21, 1
      %p186 = scmp.ne.s32.totalorder %s181, %s183
      %p187 = scmp.eq.s32.totalorder %s21, 0
      %p188 = por %p186, %p187
      %p189 = scmp.ne.s32.totalorder %s181, %s183
      %p190 = scmp.eq.s32.totalorder %s26, 1
      %p191 = por %p189, %p190
      %p192 = scmp.ne.s32.totalorder %s183, %s184
      %p193 = scmp.eq.s32.totalorder %s26, 0
      %p194 = por %p192, %p193
      %p195 = scmp.ne.s32.totalorder %s183, %s184
      %p196 = scmp.eq.s32.totalorder %s27, 1
      %p197 = por %p195, %p196
      %p199 = scmp.ne.s32.totalorder %s184, %s198
      %p200 = scmp.eq.s32.totalorder %s27, 0
      %p201 = por %p199, %p200
      %s203 = sadd.s32 %s202, 1
      %p206 = scmp.eq.s32.totalorder %s21, 1
      %p207 = scmp.ne.s32.totalorder %s202, %s204
      %p208 = scmp.eq.s32.totalorder %s21, 0
      %p209 = por %p207, %p208
      %p210 = scmp.ne.s32.totalorder %s202, %s204
      %p211 = scmp.eq.s32.totalorder %s26, 1
      %p212 = por %p210, %p211
      %p213 = scmp.ne.s32.totalorder %s204, %s205
      %p214 = scmp.eq.s32.totalorder %s26, 0
      %p215 = por %p213, %p214
      %p216 = scmp.ne.s32.totalorder %s204, %s205
      %p217 = scmp.eq.s32.totalorder %s27, 1
      %p218 = por %p216, %p217
      %p220 = scmp.ne.s32.totalorder %s205, %s219
      %p221 = scmp.eq.s32.totalorder %s27, 0
      %p222 = por %p220, %p221
      %s224 = sadd.s32 %s223, 1
      %p227 = scmp.eq.s32.totalorder %s21, 1
      %p228 = scmp.ne.s32.totalorder %s223, %s225
      %p229 = scmp.eq.s32.totalorder %s21, 0
      %p230 = por %p228, %p229
      %p231 = scmp.ne.s32.totalorder %s223, %s225
      %p232 = scmp.eq.s32.totalorder %s26, 1
      %p233 = por %p231, %p232
      %p234 = scmp.ne.s32.totalorder %s225, %s226
      %p235 = scmp.eq.s32.totalorder %s26, 0
      %p236 = por %p234, %p235
      %p237 = scmp.ne.s32.totalorder %s225, %s226
      %p238 = scmp.eq.s32.totalorder %s27, 1
      %p239 = por %p237, %p238
      %p241 = scmp.ne.s32.totalorder %s226, %s240
      %p242 = scmp.eq.s32.totalorder %s27, 0
      %p243 = por %p241, %p242
      %s244 = ssub.s32 %s21, %s28
      %p245 = scmp.eq.s32.totalorder %s244, 0
      %s247 = sadd.s32 %s246, 1
      %s248 = scalar_select %p245, %s246, %s247
      %p251 = pneg %p245
      %p252 = scmp.eq.s32.totalorder %s21, 1
      %p253 = por %p251, %p252
      %p254 = scmp.ne.s32.totalorder %s246, %s249
      %p255 = scmp.eq.s32.totalorder %s21, 0
      %p256 = por %p254, %p255
      %p257 = scmp.ne.s32.totalorder %s246, %s249
      %p258 = scmp.eq.s32.totalorder %s26, 1
      %p259 = por %p257, %p258
      %p260 = scmp.ne.s32.totalorder %s249, %s250
      %p261 = scmp.eq.s32.totalorder %s26, 0
      %p262 = por %p260, %p261
      %p263 = scmp.ne.s32.totalorder %s249, %s250
      %p264 = scmp.eq.s32.totalorder %s27, 1
      %p265 = por %p263, %p264
      %p267 = scmp.ne.s32.totalorder %s250, %s266
      %p268 = scmp.eq.s32.totalorder %s27, 0
      %p269 = por %p267, %p268
      %s270 = ssub.s32 %s21, %s28
      %p271 = scmp.eq.s32.totalorder %s270, 0
      %s273 = sadd.s32 %s272, 1
      %s274 = scalar_select %p271, %s272, %s273
      %p277 = pneg %p271
      %p278 = scmp.eq.s32.totalorder %s21, 1
      %p279 = por %p277, %p278
      %p280 = scmp.ne.s32.totalorder %s272, %s275
      %p281 = scmp.eq.s32.totalorder %s21, 0
      %p282 = por %p280, %p281
      %p283 = scmp.ne.s32.totalorder %s272, %s275
      %p284 = scmp.eq.s32.totalorder %s26, 1
      %p285 = por %p283, %p284
      %p286 = scmp.ne.s32.totalorder %s275, %s276
      %p287 = scmp.eq.s32.totalorder %s26, 0
      %p288 = por %p286, %p287
      %p289 = scmp.ne.s32.totalorder %s275, %s276
      %p290 = scmp.eq.s32.totalorder %s27, 1
      %p291 = por %p289, %p290
      %p293 = scmp.ne.s32.totalorder %s276, %s292
      %p294 = scmp.eq.s32.totalorder %s27, 0
      %p295 = por %p293, %p294
      %p296 = scmp.le.s32.totalorder 1, %s21
      %p297 = scmp.lt.s32.totalorder %s21, 3
      %p298 = pnand %p296, %p297
      %p299 = pneg %p298
      // Predicated region
      $region9: #{tpu_custom_call.1} parent=5 // pred_check
        _
      $region10: #{tpu_custom_call.1} parent=5 // pred_check_branch
        %301 = sbr.rel (%p298) target = $region12
      $region11: #{tpu_custom_call.1} parent=5 // pred_region
        %s302 = ssub.s32 %s21, 1
        // Predicated region
        $region13: #{tpu_custom_call.1} parent=11 // pred_check
          %p303 = pneg %p68
        $region14: #{tpu_custom_call.1} parent=11 // pred_check_branch
          %305 = sbr.rel (%p303) target = $region16
        $region15: #{tpu_custom_call.1} parent=11 // pred_region
          _
        $region16: #{tpu_custom_call.1} parent=11 // pred_fallthru
          _
        // Predicated region
        $region17: #{tpu_custom_call.1} parent=11 // pred_check
          %p306 = pneg %p89
        $region18: #{tpu_custom_call.1} parent=11 // pred_check_branch
          %308 = sbr.rel (%p306) target = $region20
        $region19: #{tpu_custom_call.1} parent=11 // pred_region
          _
        $region20: #{tpu_custom_call.1} parent=11 // pred_fallthru
          _
        // Predicated region
        $region21: #{tpu_custom_call.1} parent=11 // pred_check
          %p309 = pneg %p110
        $region22: #{tpu_custom_call.1} parent=11 // pred_check_branch
          %311 = sbr.rel (%p309) target = $region24
        $region23: #{tpu_custom_call.1} parent=11 // pred_region
          _
        $region24: #{tpu_custom_call.1} parent=11 // pred_fallthru
          _
        // Predicated region
        $region25: #{tpu_custom_call.1} parent=11 // pred_check
          %p312 = pneg %p131
        $region26: #{tpu_custom_call.1} parent=11 // pred_check_branch
          %314 = sbr.rel (%p312) target = $region28
        $region27: #{tpu_custom_call.1} parent=11 // pred_region
          _
        $region28: #{tpu_custom_call.1} parent=11 // pred_fallthru
          _
        // Predicated region
        $region29: #{tpu_custom_call.1} parent=11 // pred_check
          %p315 = pneg %p152
        $region30: #{tpu_custom_call.1} parent=11 // pred_check_branch
          %317 = sbr.rel (%p315) target = $region32
        $region31: #{tpu_custom_call.1} parent=11 // pred_region
          _
        $region32: #{tpu_custom_call.1} parent=11 // pred_fallthru
          _
        // Predicated region
        $region33: #{tpu_custom_call.1} parent=11 // pred_check
          %p318 = pneg %p173
        $region34: #{tpu_custom_call.1} parent=11 // pred_check_branch
          %320 = sbr.rel (%p318) target = $region36
        $region35: #{tpu_custom_call.1} parent=11 // pred_region
          _
        $region36: #{tpu_custom_call.1} parent=11 // pred_fallthru
          _
        // Predicated region
        $region37: #{tpu_custom_call.1} parent=11 // pred_check
          %p321 = pneg %p194
        $region38: #{tpu_custom_call.1} parent=11 // pred_check_branch
          %323 = sbr.rel (%p321) target = $region40
        $region39: #{tpu_custom_call.1} parent=11 // pred_region
          _
        $region40: #{tpu_custom_call.1} parent=11 // pred_fallthru
          _
        // Predicated region
        $region41: #{tpu_custom_call.1} parent=11 // pred_check
          %p324 = pneg %p215
        $region42: #{tpu_custom_call.1} parent=11 // pred_check_branch
          %326 = sbr.rel (%p324) target = $region44
        $region43: #{tpu_custom_call.1} parent=11 // pred_region
          _
        $region44: #{tpu_custom_call.1} parent=11 // pred_fallthru
          _
        // Predicated region
        $region45: #{tpu_custom_call.1} parent=11 // pred_check
          %p327 = pneg %p236
        $region46: #{tpu_custom_call.1} parent=11 // pred_check_branch
          %329 = sbr.rel (%p327) target = $region48
        $region47: #{tpu_custom_call.1} parent=11 // pred_region
          _
        $region48: #{tpu_custom_call.1} parent=11 // pred_fallthru
          _
      $region12: #{tpu_custom_call.1} parent=5 // pred_fallthru
        _
      %p330 = scmp.lt.s32.totalorder %s21, 2
      // Predicated region
      $region49: #{tpu_custom_call.1} parent=5 // pred_check
        %p331 = pneg %p330
      $region50: #{tpu_custom_call.1} parent=5 // pred_check_branch
        %333 = sbr.rel (%p331) target = $region52
      $region51: #{tpu_custom_call.1} parent=5 // pred_region
        // Predicated region
        $region53: #{tpu_custom_call.1} parent=51 // pred_check
          %p334 = pneg %p41
        $region54: #{tpu_custom_call.1} parent=51 // pred_check_branch
          %336 = sbr.rel (%p334) target = $region56
        $region55: #{tpu_custom_call.1} parent=51 // pred_region
          %p337 = scmp.lt.s32.totalorder %s21, 1
          %s338 = scalar_select %p337, %s21, 1
          %s339 = smul.addr %s338, 2
          %s340 = smul.addr %s339, 4
          %s341 = scalar_lea.vmem %s0, %s340
        $region56: #{tpu_custom_call.1} parent=51 // pred_fallthru
          _
      $region52: #{tpu_custom_call.1} parent=5 // pred_fallthru
        _
      %p342 = scmp.le.s32.totalorder 1, %s21
      %p343 = scmp.lt.s32.totalorder %s21, 3
      %p344 = pnand %p342, %p343
      %p345 = pneg %p344
      // Predicated region
      $region57: #{tpu_custom_call.1} parent=5 // pred_check
        _
      $region58: #{tpu_custom_call.1} parent=5 // pred_check_branch
        %347 = sbr.rel (%p344) target = $region60
      $region59: #{tpu_custom_call.1} parent=5 // pred_region
        %s348 = ssub.s32 %s21, 1
        %p349 = scmp.lt.s32.totalorder %s26, 1
        %s350 = scalar_select %p349, %s26, 1
        %s351 = smul.addr %s350, 2
        %s352 = smul.addr %s351, 4
        %s353 = scalar_lea.vmem %s0, %s352
        %p354 = pneg %p47
        %p355 = pneg %p44
        %p356 = pneg %p68
        %p357 = pneg %p65
        %p358 = pneg %p89
        %p359 = pneg %p86
        %p360 = pneg %p110
        %p361 = pneg %p107
        %p362 = pneg %p131
        %p363 = pneg %p128
        %p364 = pneg %p152
        %p365 = pneg %p149
        %p366 = pneg %p173
        %p367 = pneg %p170
        %p368 = pneg %p194
        %p369 = pneg %p191
        %p370 = pneg %p215
        %p371 = pneg %p212
        %p372 = pneg %p236
        %p373 = pneg %p233
        %p374 = pneg %p262
        %p375 = pneg %p259
        %s376 = sand.u32 %s249, 1
        %s377 = scalar_lea.sflag [#allocation7], %s376
        %s378 = sand.u32 %s249, 1
        %s379 = smul.addr %s378, 8
        %s380 = scalar_lea.vmem [#allocation6], %s379
        %p381 = pneg %p288
        %p382 = pneg %p285
        %p383 = scmp.lt.s32.totalorder %s26, 1
        %s384 = scalar_select %p383, %s26, 1
        %s385 = scalar_lea.vmem %s11, %s384
        %p386 = scmp.lt.s32.totalorder %s26, 1
        %s387 = scalar_select %p386, %s26, 1
        %s388 = smul.addr %s387, 2
        %s389 = smul.addr %s388, 4
        %s390 = scalar_lea.vmem %s0, %s389
        %p391 = scmp.lt.s32.totalorder %s26, 1
        %s392 = scalar_select %p391, %s26, 1
        %s393 = scalar_lea.vmem %s11, %s392
        %v394 = vld [vmem:[%s390] sm:$0xff]
        %v395 = vld [vmem:[%s1] sm:$0xf]
        %v396 = vld [vmem:[%s2] sm:$0xf]
        %398 = vset.pattern.permute.xlu0 0
        %399 = vperm.xlu0 %398, %v396
        %v400 = vpop.permute.xlu0 %399
        %v403 = vcombine.high %v394, %v394
        %vm404 = vcmask 31744
        %v406 = vsel %vm404, %v395, 0
        %vm408 = vcmask 1043456
        %v409 = vsel %vm408, %v394, 0
        %v411 = vsel %vm408, %v403, 0
        %413 = vmatprep.subr.mxu0 %v411
        %414 = vmatpush1.msra.mxu0 %v409
        %415 = vmatprep.subr.mxu0 0.0
        %416 = vmatpush1.msra.mxu0 0.0
        %417 = vmatprep.subr.mxu0 0.0
        %418 = vmatpush1.msra.mxu0 0.0
        %419 = vmatprep.subr.mxu0 0.0
        %420 = vmatpush1.msra.mxu0 0.0
        %421 = vmatprep.subr.mxu0 0.0
        %422 = vmatpush1.msra.mxu0 0.0
        %423 = vmatprep.subr.mxu0 0.0
        %424 = vmatpush1.msra.mxu0 0.0
        %425 = vmatprep.subr.mxu0 0.0
        %426 = vmatpush1.msra.mxu0 0.0
        %427 = vmatprep.subr.mxu0 0.0
        %428 = vmatpush1.msra.mxu0 0.0
        %429 = vmatprep.subr.mxu0 0.0
        %430 = vmatpush1.msra.mxu0 0.0
        %431 = vmatprep.subr.mxu0 0.0
        %432 = vmatpush1.msra.mxu0 0.0
        %433 = vmatprep.subr.mxu0 0.0
        %434 = vmatpush1.msra.mxu0 0.0
        %435 = vmatprep.subr.mxu0 0.0
        %436 = vmatpush1.msra.mxu0 0.0
        %437 = vmatprep.subr.mxu0 0.0
        %438 = vmatpush1.msra.mxu0 0.0
        %439 = vmatprep.subr.mxu0 0.0
        %440 = vmatpush1.msra.mxu0 0.0
        %441 = vmatprep.subr.mxu0 0.0
        %442 = vmatpush1.msra.mxu0 0.0
        %443 = vmatprep.subr.mxu0 0.0
        %444 = vmatpush1.msra.mxu0 0.0
        %445 = vmatprep.subr.mxu0 0.0
        %446 = vmatpush1.msra.mxu0 0.0
        %447 = vmatprep.subr.mxu0 0.0
        %448 = vmatpush1.msra.mxu0 0.0
        %449 = vmatprep.subr.mxu0 0.0
        %450 = vmatpush1.msra.mxu0 0.0
        %451 = vmatprep.subr.mxu0 0.0
        %452 = vmatpush1.msra.mxu0 0.0
        %453 = vmatprep.subr.mxu0 0.0
        %454 = vmatpush1.msra.mxu0 0.0
        %455 = vmatprep.subr.mxu0 0.0
        %456 = vmatpush1.msra.mxu0 0.0
        %457 = vmatprep.subr.mxu0 0.0
        %458 = vmatpush1.msra.mxu0 0.0
        %459 = vmatprep.subr.mxu0 0.0
        %460 = vmatpush1.msra.mxu0 0.0
        %461 = vmatprep.subr.mxu0 0.0
        %462 = vmatpush1.msra.mxu0 0.0
        %463 = vmatprep.subr.mxu0 0.0
        %464 = vmatpush1.msra.mxu0 0.0
        %465 = vmatprep.subr.mxu0 0.0
        %466 = vmatpush1.msra.mxu0 0.0
        %467 = vmatprep.subr.mxu0 0.0
        %468 = vmatpush1.msra.mxu0 0.0
        %469 = vmatprep.subr.mxu0 0.0
        %470 = vmatpush1.msra.mxu0 0.0
        %471 = vmatprep.subr.mxu0 0.0
        %472 = vmatpush1.msra.mxu0 0.0
        %473 = vmatprep.subr.mxu0 0.0
        %474 = vmatpush1.msra.mxu0 0.0
        %475 = vmatprep.subr.mxu0 0.0
        %476 = vmatpush1.msra.mxu0 0.0
        %477 = vmatprep.mubr.f32.mxu0 0.0
        %478 = vmatmul.mubr.f32.gmra.mrb[0].mxu0 %v406
        %v479 = vpop.f32.mrb[0].mxu0
        %v480 = vadd.f32 %v400, %v479
        %v481 = vpop.f32.mrb[0].mxu0
        %v482 = vadd.f32 %v400, %v481
        %483 = vdwg.mxu0
        %484 = vst [vmem:[#allocation2] sm:$0xff] 0.0
        %v487 = vcombine.low %v480, %v482
        %v489 = vunpack.c.l.s4 1983009808
        %v490 = vunpack.c.0.s8 %v489
        %v491 = vlaneseq
        %v492 = vshrl.u32 %v491, 7
        %v493 = vsub.s32 %v490, %v492
        %v494 = vrot.slane %v487, %v493
        %496 = vst [vmem:[#allocation2 + $0x2] sm:$0xf] %v494
        %v497 = vld [vmem:[#allocation2] sm:$0x3f]
        %v498 = vld [vmem:[%s9] ss:$8 sm:$0x3]
        %v500 = vlaneseq
        %v501 = vshrl.u32 %v500, 7
        %v502 = vsub.s32 0, %v501
        %v503 = vrot.slane %v498, %v502
        %v504 = vlaneseq
        %v505 = vshrl.u32 %v504, 7
        %v506 = vsub.s32 1, %v505
        %v507 = vrot.slane %v498, %v506
        %v508 = vcombine.low %v503, %v507
        %v510 = vunpack.c.l.s4 1983009808
        %v511 = vunpack.c.0.s8 %v510
        %v512 = vlaneseq
        %v513 = vshrl.u32 %v512, 7
        %v514 = vsub.s32 %v511, %v513
        %v515 = vrot.slane %v508, %v514
        %516 = vrot.lane.b32.xlu0 %v515, 111
        %v517 = vpop.permute.xlu0 %516
        %v518 = vrot.slane %v517, 6
        %vm519 = vcmask 908288
        %v520 = vsel %vm519, %v518, %v517
        %v522 = vmul.f32 %v497, %v520
        %v524 = vcombine.high %v522, %v522
        %v526 = vunpack.c.l.s4 1983009808
        %v527 = vunpack.c.0.s8 %v526
        %v528 = vlaneseq
        %v529 = vshrl.u32 %v528, 7
        %v530 = vsub.s32 %v527, %v529
        %v531 = vrot.slane %v522, %v530
        %v533 = vunpack.c.l.s4 1983009808
        %v534 = vunpack.c.0.s8 %v533
        %v535 = vlaneseq
        %v536 = vshrl.u32 %v535, 7
        %v537 = vsub.s32 %v534, %v536
        %v538 = vrot.slane %v524, %v537
        %v539 = vcombine.high %v531, %v531
        %540 = vrot.lane.b32.xlu0 %v531, 17
        %v541 = vpop.permute.xlu0 %540
        %542 = vrot.lane.b32.xlu0 %v539, 17
        %v543 = vpop.permute.xlu0 %542
        %544 = vrot.lane.b32.xlu0 %v538, 17
        %v545 = vpop.permute.xlu0 %544
        %vm546 = vcmask 138240
        %v547 = vsel %vm546, %v541, %v543
        %v548 = vsel %vm546, %v543, %v545
        %551 = vst [vmem:[#allocation3] sm:$0x3] %v547
        %552 = vst [vmem:[#allocation3 + $0x8] sm:$0x3] %v548
        %v553 = vld [vmem:[#allocation2] sm:$0x3f]
        %s554 = scalar_lea.vmem %s9, 1
        %v555 = vld [vmem:[%s554] ss:$8 sm:$0x3]
        %v557 = vlaneseq
        %v558 = vshrl.u32 %v557, 7
        %v559 = vsub.s32 0, %v558
        %v560 = vrot.slane %v555, %v559
        %v561 = vlaneseq
        %v562 = vshrl.u32 %v561, 7
        %v563 = vsub.s32 1, %v562
        %v564 = vrot.slane %v555, %v563
        %v565 = vcombine.low %v560, %v564
        %v567 = vunpack.c.l.s4 1983009808
        %v568 = vunpack.c.0.s8 %v567
        %v569 = vlaneseq
        %v570 = vshrl.u32 %v569, 7
        %v571 = vsub.s32 %v568, %v570
        %v572 = vrot.slane %v565, %v571
        %573 = vrot.lane.b32.xlu0 %v572, 112
        %v574 = vpop.permute.xlu0 %573
        %v575 = vrot.slane %v574, 6
        %vm576 = vcmask 916480
        %v577 = vsel %vm576, %v575, %v574
        %v579 = vmul.f32 %v553, %v577
        %v581 = vcombine.low %v579, %v579
        %v583 = vunpack.c.l.s4 1983009808
        %v584 = vunpack.c.0.s8 %v583
        %v585 = vlaneseq
        %v586 = vshrl.u32 %v585, 7
        %v587 = vsub.s32 %v584, %v586
        %v588 = vrot.slane %v581, %v587
        %v590 = vunpack.c.l.s4 1983009808
        %v591 = vunpack.c.0.s8 %v590
        %v592 = vlaneseq
        %v593 = vshrl.u32 %v592, 7
        %v594 = vsub.s32 %v591, %v593
        %v595 = vrot.slane %v579, %v594
        %v596 = vcombine.high %v588, %v588
        %597 = vrot.lane.b32.xlu0 %v588, 16
        %v598 = vpop.permute.xlu0 %597
        %599 = vrot.lane.b32.xlu0 %v596, 16
        %v600 = vpop.permute.xlu0 %599
        %601 = vrot.lane.b32.xlu0 %v595, 16
        %v602 = vpop.permute.xlu0 %601
        %vm603 = vcmask 130048
        %v604 = vsel %vm603, %v598, %v600
        %v605 = vsel %vm603, %v600, %v602
        %608 = vst [vmem:[#allocation3] sm:$0xc] %v604
        %609 = vst [vmem:[#allocation3 + $0x8] sm:$0xc] %v605
        %v610 = vld [vmem:[#allocation2] sm:$0x3f]
        %s611 = scalar_lea.vmem %s9, 2
        %v612 = vld [vmem:[%s611] ss:$8 sm:$0x3]
        %v614 = vlaneseq
        %v615 = vshrl.u32 %v614, 7
        %v616 = vsub.s32 0, %v615
        %v617 = vrot.slane %v612, %v616
        %v618 = vlaneseq
        %v619 = vshrl.u32 %v618, 7
        %v620 = vsub.s32 1, %v619
        %v621 = vrot.slane %v612, %v620
        %v622 = vcombine.low %v617, %v621
        %v624 = vunpack.c.l.s4 1983009808
        %v625 = vunpack.c.0.s8 %v624
        %v626 = vlaneseq
        %v627 = vshrl.u32 %v626, 7
        %v628 = vsub.s32 %v625, %v627
        %v629 = vrot.slane %v622, %v628
        %630 = vrot.lane.b32.xlu0 %v629, 113
        %v631 = vpop.permute.xlu0 %630
        %v632 = vrot.slane %v631, 6
        %vm633 = vcmask 924672
        %v634 = vsel %vm633, %v632, %v631
        %v636 = vmul.f32 %v610, %v634
        %v638 = vcombine.high %v636, %v636
        %v640 = vunpack.c.l.s4 1983009808
        %v641 = vunpack.c.0.s8 %v640
        %v642 = vlaneseq
        %v643 = vshrl.u32 %v642, 7
        %v644 = vsub.s32 %v641, %v643
        %v645 = vrot.slane %v636, %v644
        %v647 = vunpack.c.l.s4 1983009808
        %v648 = vunpack.c.0.s8 %v647
        %v649 = vlaneseq
        %v650 = vshrl.u32 %v649, 7
        %v651 = vsub.s32 %v648, %v650
        %v652 = vrot.slane %v638, %v651
        %v653 = vcombine.low %v645, %v645
        %v654 = vcombine.low %v652, %v652
        %655 = vrot.lane.b32.xlu0 %v653, 15
        %v656 = vpop.permute.xlu0 %655
        %657 = vrot.lane.b32.xlu0 %v645, 15
        %v658 = vpop.permute.xlu0 %657
        %659 = vrot.lane.b32.xlu0 %v654, 15
        %v660 = vpop.permute.xlu0 %659
        %vm661 = vcmask 121856
        %v662 = vsel %vm661, %v656, %v658
        %v663 = vsel %vm661, %v658, %v660
        %666 = vst [vmem:[#allocation3] sm:$0x30] %v662
        %667 = vst [vmem:[#allocation3 + $0x8] sm:$0x30] %v663
        %v668 = vld [vmem:[#allocation2] sm:$0x3f]
        %s669 = scalar_lea.vmem %s9, 3
        %v670 = vld [vmem:[%s669] ss:$8 sm:$0x3]
        %v672 = vlaneseq
        %v673 = vshrl.u32 %v672, 7
        %v674 = vsub.s32 0, %v673
        %v675 = vrot.slane %v670, %v674
        %v676 = vlaneseq
        %v677 = vshrl.u32 %v676, 7
        %v678 = vsub.s32 1, %v677
        %v679 = vrot.slane %v670, %v678
        %v680 = vcombine.low %v675, %v679
        %v682 = vunpack.c.l.s4 1983009808
        %v683 = vunpack.c.0.s8 %v682
        %v684 = vlaneseq
        %v685 = vshrl.u32 %v684, 7
        %v686 = vsub.s32 %v683, %v685
        %v687 = vrot.slane %v680, %v686
        %688 = vrot.lane.b32.xlu0 %v687, 127
        %v689 = vpop.permute.xlu0 %688
        %v690 = vrot.slane %v689, 6
        %vm691 = vcmask 1039360
        %v692 = vsel %vm691, %v690, %v689
        %v694 = vmul.f32 %v668, %v692
        %v696 = vcombine.low %v694, %v694
        %v698 = vunpack.c.l.s4 1983009808
        %v699 = vunpack.c.0.s8 %v698
        %v700 = vlaneseq
        %v701 = vshrl.u32 %v700, 7
        %v702 = vsub.s32 %v699, %v701
        %v703 = vrot.slane %v696, %v702
        %v705 = vunpack.c.l.s4 1983009808
        %v706 = vunpack.c.0.s8 %v705
        %v707 = vlaneseq
        %v708 = vshrl.u32 %v707, 7
        %v709 = vsub.s32 %v706, %v708
        %v710 = vrot.slane %v694, %v709
        %v711 = vcombine.low %v703, %v703
        %v712 = vcombine.low %v710, %v710
        %713 = vrot.lane.b32.xlu0 %v711, 1
        %v714 = vpop.permute.xlu0 %713
        %715 = vrot.lane.b32.xlu0 %v703, 1
        %v716 = vpop.permute.xlu0 %715
        %717 = vrot.lane.b32.xlu0 %v712, 1
        %v718 = vpop.permute.xlu0 %717
        %vm719 = vcmask 7168
        %v720 = vsel %vm719, %v714, %v716
        %v721 = vsel %vm719, %v716, %v718
        %724 = vst [vmem:[#allocation3] sm:$0xc0] %v720
        %725 = vst [vmem:[#allocation3 + $0x8] sm:$0xc0] %v721
        %v726 = vld [vmem:[#allocation2 + $0x2] sm:$0xf]
        %s727 = scalar_lea.vmem %s9, 4
        %v728 = vld [vmem:[%s727] ss:$8 sm:$0x3]
        %v730 = vlaneseq
        %v731 = vshrl.u32 %v730, 7
        %v732 = vsub.s32 0, %v731
        %v733 = vrot.slane %v728, %v732
        %v734 = vlaneseq
        %v735 = vshrl.u32 %v734, 7
        %v736 = vsub.s32 1, %v735
        %v737 = vrot.slane %v728, %v736
        %v738 = vcombine.low %v733, %v737
        %v740 = vunpack.c.l.s4 1983009808
        %v741 = vunpack.c.0.s8 %v740
        %v742 = vlaneseq
        %v743 = vshrl.u32 %v742, 7
        %v744 = vsub.s32 %v741, %v743
        %v745 = vrot.slane %v738, %v744
        %v747 = vmul.f32 %v726, %v745
        %v750 = vunpack.c.l.s4 1983009808
        %v751 = vunpack.c.0.s8 %v750
        %v752 = vlaneseq
        %v753 = vshrl.u32 %v752, 7
        %v754 = vsub.s32 %v751, %v753
        %v755 = vrot.slane %v747, %v754
        %v756 = vcombine.high %v755, %v755
        %759 = vst [vmem:[#allocation3 + $0x10] sm:$0x3] %v755
        %760 = vst [vmem:[#allocation3 + $0x18] sm:$0x3] %v756
        %v761 = vld [vmem:[#allocation2 + $0x2] sm:$0x3f]
        %s762 = scalar_lea.vmem %s9, 5
        %v763 = vld [vmem:[%s762] ss:$8 sm:$0x3]
        %v765 = vlaneseq
        %v766 = vshrl.u32 %v765, 7
        %v767 = vsub.s32 0, %v766
        %v768 = vrot.slane %v763, %v767
        %v769 = vlaneseq
        %v770 = vshrl.u32 %v769, 7
        %v771 = vsub.s32 1, %v770
        %v772 = vrot.slane %v763, %v771
        %v773 = vcombine.low %v768, %v772
        %v775 = vunpack.c.l.s4 1983009808
        %v776 = vunpack.c.0.s8 %v775
        %v777 = vlaneseq
        %v778 = vshrl.u32 %v777, 7
        %v779 = vsub.s32 %v776, %v778
        %v780 = vrot.slane %v773, %v779
        %781 = vrot.lane.b32.xlu0 %v780, 1
        %v782 = vpop.permute.xlu0 %781
        %v783 = vrot.slane %v782, 6
        %v784 = vsel %vm719, %v783, %v782
        %v786 = vmul.f32 %v761, %v784
        %v788 = vcombine.low %v786, %v786
        %v790 = vunpack.c.l.s4 1983009808
        %v791 = vunpack.c.0.s8 %v790
        %v792 = vlaneseq
        %v793 = vshrl.u32 %v792, 7
        %v794 = vsub.s32 %v791, %v793
        %v795 = vrot.slane %v788, %v794
        %v797 = vunpack.c.l.s4 1983009808
        %v798 = vunpack.c.0.s8 %v797
        %v799 = vlaneseq
        %v800 = vshrl.u32 %v799, 7
        %v801 = vsub.s32 %v798, %v800
        %v802 = vrot.slane %v786, %v801
        %v803 = vcombine.high %v795, %v795
        %804 = vrot.lane.b32.xlu0 %v795, 127
        %v805 = vpop.permute.xlu0 %804
        %806 = vrot.lane.b32.xlu0 %v803, 127
        %v807 = vpop.permute.xlu0 %806
        %808 = vrot.lane.b32.xlu0 %v802, 127
        %v809 = vpop.permute.xlu0 %808
        %v810 = vsel %vm691, %v805, %v807
        %v811 = vsel %vm691, %v807, %v809
        %814 = vst [vmem:[#allocation3 + $0x10] sm:$0xc] %v810
        %815 = vst [vmem:[#allocation3 + $0x18] sm:$0xc] %v811
        %v816 = vld [vmem:[#allocation2 + $0x2] sm:$0x3f]
        %s817 = scalar_lea.vmem %s9, 6
        %v818 = vld [vmem:[%s817] ss:$8 sm:$0x3]
        %v820 = vlaneseq
        %v821 = vshrl.u32 %v820, 7
        %v822 = vsub.s32 0, %v821
        %v823 = vrot.slane %v818, %v822
        %v824 = vlaneseq
        %v825 = vshrl.u32 %v824, 7
        %v826 = vsub.s32 1, %v825
        %v827 = vrot.slane %v818, %v826
        %v828 = vcombine.low %v823, %v827
        %v830 = vunpack.c.l.s4 1983009808
        %v831 = vunpack.c.0.s8 %v830
        %v832 = vlaneseq
        %v833 = vshrl.u32 %v832, 7
        %v834 = vsub.s32 %v831, %v833
        %v835 = vrot.slane %v828, %v834
        %836 = vrot.lane.b32.xlu0 %v835, 15
        %v837 = vpop.permute.xlu0 %836
        %v838 = vrot.slane %v837, 6
        %v839 = vsel %vm661, %v838, %v837
        %v841 = vmul.f32 %v816, %v839
        %v843 = vcombine.high %v841, %v841
        %v845 = vunpack.c.l.s4 1983009808
        %v846 = vunpack.c.0.s8 %v845
        %v847 = vlaneseq
        %v848 = vshrl.u32 %v847, 7
        %v849 = vsub.s32 %v846, %v848
        %v850 = vrot.slane %v841, %v849
        %v852 = vunpack.c.l.s4 1983009808
        %v853 = vunpack.c.0.s8 %v852
        %v854 = vlaneseq
        %v855 = vshrl.u32 %v854, 7
        %v856 = vsub.s32 %v853, %v855
        %v857 = vrot.slane %v843, %v856
        %v858 = vcombine.low %v850, %v850
        %v859 = vcombine.low %v857, %v857
        %860 = vrot.lane.b32.xlu0 %v858, 113
        %v861 = vpop.permute.xlu0 %860
        %862 = vrot.lane.b32.xlu0 %v850, 113
        %v863 = vpop.permute.xlu0 %862
        %864 = vrot.lane.b32.xlu0 %v859, 113
        %v865 = vpop.permute.xlu0 %864
        %v866 = vsel %vm633, %v861, %v863
        %v867 = vsel %vm633, %v863, %v865
        %870 = vst [vmem:[#allocation3 + $0x10] sm:$0x30] %v866
        %871 = vst [vmem:[#allocation3 + $0x18] sm:$0x30] %v867
        %v872 = vld [vmem:[#allocation2 + $0x2] sm:$0x3f]
        %s873 = scalar_lea.vmem %s9, 7
        %v874 = vld [vmem:[%s873] ss:$8 sm:$0x3]
        %v876 = vlaneseq
        %v877 = vshrl.u32 %v876, 7
        %v878 = vsub.s32 0, %v877
        %v879 = vrot.slane %v874, %v878
        %v880 = vlaneseq
        %v881 = vshrl.u32 %v880, 7
        %v882 = vsub.s32 1, %v881
        %v883 = vrot.slane %v874, %v882
        %v884 = vcombine.low %v879, %v883
        %v886 = vunpack.c.l.s4 1983009808
        %v887 = vunpack.c.0.s8 %v886
        %v888 = vlaneseq
        %v889 = vshrl.u32 %v888, 7
        %v890 = vsub.s32 %v887, %v889
        %v891 = vrot.slane %v884, %v890
        %892 = vrot.lane.b32.xlu0 %v891, 16
        %v893 = vpop.permute.xlu0 %892
        %v894 = vrot.slane %v893, 6
        %v895 = vsel %vm603, %v894, %v893
        %v897 = vmul.f32 %v872, %v895
        %v899 = vcombine.low %v897, %v897
        %v901 = vunpack.c.l.s4 1983009808
        %v902 = vunpack.c.0.s8 %v901
        %v903 = vlaneseq
        %v904 = vshrl.u32 %v903, 7
        %v905 = vsub.s32 %v902, %v904
        %v906 = vrot.slane %v899, %v905
        %v908 = vunpack.c.l.s4 1983009808
        %v909 = vunpack.c.0.s8 %v908
        %v910 = vlaneseq
        %v911 = vshrl.u32 %v910, 7
        %v912 = vsub.s32 %v909, %v911
        %v913 = vrot.slane %v897, %v912
        %v914 = vcombine.low %v906, %v906
        %v915 = vcombine.low %v913, %v913
        %916 = vrot.lane.b32.xlu0 %v914, 112
        %v917 = vpop.permute.xlu0 %916
        %918 = vrot.lane.b32.xlu0 %v906, 112
        %v919 = vpop.permute.xlu0 %918
        %920 = vrot.lane.b32.xlu0 %v915, 112
        %v921 = vpop.permute.xlu0 %920
        %v922 = vsel %vm576, %v917, %v919
        %v923 = vsel %vm576, %v919, %v921
        %926 = vst [vmem:[#allocation3 + $0x10] sm:$0xc0] %v922
        %927 = vst [vmem:[#allocation3 + $0x18] sm:$0xc0] %v923
        %v928 = vld [vmem:[#allocation2 + $0x2] sm:$0x3f]
        %s929 = scalar_lea.vmem %s9, 16
        %v930 = vld [vmem:[%s929] ss:$8 sm:$0x3]
        %v932 = vlaneseq
        %v933 = vshrl.u32 %v932, 7
        %v934 = vsub.s32 0, %v933
        %v935 = vrot.slane %v930, %v934
        %v936 = vlaneseq
        %v937 = vshrl.u32 %v936, 7
        %v938 = vsub.s32 1, %v937
        %v939 = vrot.slane %v930, %v938
        %v940 = vcombine.low %v935, %v939
        %v942 = vunpack.c.l.s4 1983009808
        %v943 = vunpack.c.0.s8 %v942
        %v944 = vlaneseq
        %v945 = vshrl.u32 %v944, 7
        %v946 = vsub.s32 %v943, %v945
        %v947 = vrot.slane %v940, %v946
        %948 = vrot.lane.b32.xlu0 %v947, 17
        %v949 = vpop.permute.xlu0 %948
        %v950 = vrot.slane %v949, 6
        %v951 = vsel %vm546, %v950, %v949
        %v953 = vmul.f32 %v928, %v951
        %v955 = vcombine.high %v953, %v953
        %v957 = vunpack.c.l.s4 1983009808
        %v958 = vunpack.c.0.s8 %v957
        %v959 = vlaneseq
        %v960 = vshrl.u32 %v959, 7
        %v961 = vsub.s32 %v958, %v960
        %v962 = vrot.slane %v953, %v961
        %v964 = vunpack.c.l.s4 1983009808
        %v965 = vunpack.c.0.s8 %v964
        %v966 = vlaneseq
        %v967 = vshrl.u32 %v966, 7
        %v968 = vsub.s32 %v965, %v967
        %v969 = vrot.slane %v955, %v968
        %v970 = vcombine.high %v962, %v962
        %971 = vrot.lane.b32.xlu0 %v962, 111
        %v972 = vpop.permute.xlu0 %971
        %973 = vrot.lane.b32.xlu0 %v970, 111
        %v974 = vpop.permute.xlu0 %973
        %975 = vrot.lane.b32.xlu0 %v969, 111
        %v976 = vpop.permute.xlu0 %975
        %v977 = vsel %vm519, %v972, %v974
        %v978 = vsel %vm519, %v974, %v976
        %981 = vst [vmem:[#allocation3 + $0x20] sm:$0x3] %v977
        %982 = vst [vmem:[#allocation3 + $0x28] sm:$0x3] %v978
        %v983 = vld [vmem:[%s3] sm:$0xff]
        %v984 = vld [vmem:[%s3 + $0x8] sm:$0xff]
        %v985 = vld [vmem:[%s3 + $0x10] sm:$0xff]
        %v986 = vld [vmem:[%s3 + $0x18] sm:$0xff]
        %v987 = vld [vmem:[#allocation3] sm:$0xff]
        %v988 = vld [vmem:[#allocation3 + $0x8] sm:$0xff]
        %v989 = vld [vmem:[#allocation3 + $0x10] sm:$0xff]
        %v990 = vld [vmem:[#allocation3 + $0x18] sm:$0xff]
        %v991 = vld [vmem:[#allocation3 + $0x20] sm:$0x3]
        %v992 = vld [vmem:[#allocation3 + $0x28] sm:$0x3]
        %v993 = vld [vmem:[%s4] sm:$0xff]
        %v994 = vld [vmem:[%s4 + $0x8] sm:$0xff]
        %v995 = vld [vmem:[%s4 + $0x10] sm:$0xff]
        %v996 = vld [vmem:[%s4 + $0x18] sm:$0xff]
        %998 = vset.pattern.permute.xlu0 0
        %999 = vperm.xlu0 %998, %v993
        %v1000 = vpop.permute.xlu0 %999
        %1003 = vset.pattern.permute.xlu0 0
        %1004 = vperm.xlu0 %1003, %v994
        %v1005 = vpop.permute.xlu0 %1004
        %1008 = vset.pattern.permute.xlu0 0
        %1009 = vperm.xlu0 %1008, %v995
        %v1010 = vpop.permute.xlu0 %1009
        %1013 = vset.pattern.permute.xlu0 0
        %1014 = vperm.xlu0 %1013, %v996
        %v1015 = vpop.permute.xlu0 %1014
        %vm1017 = vcmask 146432
        %v1019 = vsel %vm1017, %v983, 0
        %v1022 = vsel %vm1017, %v984, 0
        %v1025 = vsel %vm1017, %v985, 0
        %v1028 = vsel %vm1017, %v986, 0
        %vm1030 = vcmask 1041408
        %v1032 = vsel %vm1030, %v991, 0
        %v1035 = vsel %vm1030, %v992, 0
        %1037 = vmatprep.subr.mxu0 %v988
        %1038 = vmatpush1.msra.mxu0 %v987
        %1039 = vmatprep.subr.mxu0 %v990
        %1040 = vmatpush1.msra.mxu0 %v989
        %1041 = vmatprep.subr.mxu0 %v1035
        %1042 = vmatpush1.msra.mxu0 %v1032
        %1043 = vmatprep.subr.mxu0 0.0
        %1044 = vmatpush1.msra.mxu0 0.0
        %1045 = vmatprep.subr.mxu0 0.0
        %1046 = vmatpush1.msra.mxu0 0.0
        %1047 = vmatprep.subr.mxu0 0.0
        %1048 = vmatpush1.msra.mxu0 0.0
        %1049 = vmatprep.subr.mxu0 0.0
        %1050 = vmatpush1.msra.mxu0 0.0
        %1051 = vmatprep.subr.mxu0 0.0
        %1052 = vmatpush1.msra.mxu0 0.0
        %1053 = vmatprep.subr.mxu0 0.0
        %1054 = vmatpush1.msra.mxu0 0.0
        %1055 = vmatprep.subr.mxu0 0.0
        %1056 = vmatpush1.msra.mxu0 0.0
        %1057 = vmatprep.subr.mxu0 0.0
        %1058 = vmatpush1.msra.mxu0 0.0
        %1059 = vmatprep.subr.mxu0 0.0
        %1060 = vmatpush1.msra.mxu0 0.0
        %1061 = vmatprep.subr.mxu0 0.0
        %1062 = vmatpush1.msra.mxu0 0.0
        %1063 = vmatprep.subr.mxu0 0.0
        %1064 = vmatpush1.msra.mxu0 0.0
        %1065 = vmatprep.subr.mxu0 0.0
        %1066 = vmatpush1.msra.mxu0 0.0
        %1067 = vmatprep.subr.mxu0 0.0
        %1068 = vmatpush1.msra.mxu0 0.0
        %1069 = vmatprep.subr.mxu0 0.0
        %1070 = vmatpush1.msra.mxu0 0.0
        %1071 = vmatprep.subr.mxu0 0.0
        %1072 = vmatpush1.msra.mxu0 0.0
        %1073 = vmatprep.subr.mxu0 0.0
        %1074 = vmatpush1.msra.mxu0 0.0
        %1075 = vmatprep.subr.mxu0 0.0
        %1076 = vmatpush1.msra.mxu0 0.0
        %1077 = vmatprep.subr.mxu0 0.0
        %1078 = vmatpush1.msra.mxu0 0.0
        %1079 = vmatprep.subr.mxu0 0.0
        %1080 = vmatpush1.msra.mxu0 0.0
        %1081 = vmatprep.subr.mxu0 0.0
        %1082 = vmatpush1.msra.mxu0 0.0
        %1083 = vmatprep.subr.mxu0 0.0
        %1084 = vmatpush1.msra.mxu0 0.0
        %1085 = vmatprep.subr.mxu0 0.0
        %1086 = vmatpush1.msra.mxu0 0.0
        %1087 = vmatprep.subr.mxu0 0.0
        %1088 = vmatpush1.msra.mxu0 0.0
        %1089 = vmatprep.subr.mxu0 0.0
        %1090 = vmatpush1.msra.mxu0 0.0
        %1091 = vmatprep.subr.mxu0 0.0
        %1092 = vmatpush1.msra.mxu0 0.0
        %1093 = vmatprep.subr.mxu0 0.0
        %1094 = vmatpush1.msra.mxu0 0.0
        %1095 = vmatprep.subr.mxu0 0.0
        %1096 = vmatpush1.msra.mxu0 0.0
        %1097 = vmatprep.subr.mxu0 0.0
        %1098 = vmatpush1.msra.mxu0 0.0
        %1099 = vmatprep.subr.mxu0 0.0
        %1100 = vmatpush1.msra.mxu0 0.0
        %1101 = vmatprep.mubr.f32.mxu0 0.0
        %1102 = vmatmul.mubr.f32.gmra.mrb[0].mxu0 %v1019
        %v1103 = vpop.f32.mrb[0].mxu0
        %v1104 = vadd.f32 %v1000, %v1103
        %v1105 = vpop.f32.mrb[0].mxu0
        %v1106 = vadd.f32 %v1000, %v1105
        %1107 = vmatprep.mubr.f32.mxu0 0.0
        %1108 = vmatmul.mubr.f32.gmra.mrb[0].mxu0 %v1022
        %v1109 = vpop.f32.mrb[0].mxu0
        %v1110 = vadd.f32 %v1005, %v1109
        %v1111 = vpop.f32.mrb[0].mxu0
        %v1112 = vadd.f32 %v1005, %v1111
        %1113 = vmatprep.mubr.f32.mxu0 0.0
        %1114 = vmatmul.mubr.f32.gmra.mrb[0].mxu0 %v1025
        %v1115 = vpop.f32.mrb[0].mxu0
        %v1116 = vadd.f32 %v1010, %v1115
        %v1117 = vpop.f32.mrb[0].mxu0
        %v1118 = vadd.f32 %v1010, %v1117
        %1119 = vmatprep.mubr.f32.mxu0 0.0
        %1120 = vmatmul.mubr.f32.gmra.mrb[0].mxu0 %v1028
        %v1121 = vpop.f32.mrb[0].mxu0
        %v1122 = vadd.f32 %v1015, %v1121
        %v1123 = vpop.f32.mrb[0].mxu0
        %v1124 = vadd.f32 %v1015, %v1123
        %1125 = vdwg.mxu0
        %v1126 = vmax.f32 %v1104, 0.0
        %v1127 = vmax.f32 %v1106, 0.0
        %v1128 = vmax.f32 %v1110, 0.0
        %v1129 = vmax.f32 %v1112, 0.0
        %v1130 = vmax.f32 %v1116, 0.0
        %v1131 = vmax.f32 %v1118, 0.0
        %v1132 = vmax.f32 %v1122, 0.0
        %v1133 = vmax.f32 %v1124, 0.0
        %v1134 = vld [vmem:[%s5] sm:$0xff]
        %v1135 = vld [vmem:[%s5 + $0x8] sm:$0xff]
        %v1136 = vld [vmem:[%s5 + $0x10] sm:$0xff]
        %v1137 = vld [vmem:[%s5 + $0x18] sm:$0xff]
        %v1138 = vld [vmem:[%s6] sm:$0xff]
        %v1139 = vld [vmem:[%s6 + $0x8] sm:$0xff]
        %v1140 = vld [vmem:[%s6 + $0x10] sm:$0xff]
        %v1141 = vld [vmem:[%s6 + $0x18] sm:$0xff]
        %1143 = vset.pattern.permute.xlu0 0
        %1144 = vperm.xlu0 %1143, %v1138
        %v1145 = vpop.permute.xlu0 %1144
        %1148 = vset.pattern.permute.xlu0 0
        %1149 = vperm.xlu0 %1148, %v1139
        %v1150 = vpop.permute.xlu0 %1149
        %1153 = vset.pattern.permute.xlu0 0
        %1154 = vperm.xlu0 %1153, %v1140
        %v1155 = vpop.permute.xlu0 %1154
        %1158 = vset.pattern.permute.xlu0 0
        %1159 = vperm.xlu0 %1158, %v1141
        %v1160 = vpop.permute.xlu0 %1159
        %vm1162 = vcmask 261120
        %v1164 = vsel %vm1162, %v1134, 0
        %v1167 = vsel %vm1162, %v1135, 0
        %v1170 = vsel %vm1162, %v1136, 0
        %v1173 = vsel %vm1162, %v1137, 0
        %1175 = vmatprep.subr.mxu0 %v1127
        %1176 = vmatpush1.msra.mxu0 %v1126
        %1177 = vmatprep.subr.mxu0 %v1129
        %1178 = vmatpush1.msra.mxu0 %v1128
        %1179 = vmatprep.subr.mxu0 %v1131
        %1180 = vmatpush1.msra.mxu0 %v1130
        %1181 = vmatprep.subr.mxu0 %v1133
        %1182 = vmatpush1.msra.mxu0 %v1132
        %1183 = vmatprep.subr.mxu0 0.0
        %1184 = vmatpush1.msra.mxu0 0.0
        %1185 = vmatprep.subr.mxu0 0.0
        %1186 = vmatpush1.msra.mxu0 0.0
        %1187 = vmatprep.subr.mxu0 0.0
        %1188 = vmatpush1.msra.mxu0 0.0
        %1189 = vmatprep.subr.mxu0 0.0
        %1190 = vmatpush1.msra.mxu0 0.0
        %1191 = vmatprep.subr.mxu0 0.0
        %1192 = vmatpush1.msra.mxu0 0.0
        %1193 = vmatprep.subr.mxu0 0.0
        %1194 = vmatpush1.msra.mxu0 0.0
        %1195 = vmatprep.subr.mxu0 0.0
        %1196 = vmatpush1.msra.mxu0 0.0
        %1197 = vmatprep.subr.mxu0 0.0
        %1198 = vmatpush1.msra.mxu0 0.0
        %1199 = vmatprep.subr.mxu0 0.0
        %1200 = vmatpush1.msra.mxu0 0.0
        %1201 = vmatprep.subr.mxu0 0.0
        %1202 = vmatpush1.msra.mxu0 0.0
        %1203 = vmatprep.subr.mxu0 0.0
        %1204 = vmatpush1.msra.mxu0 0.0
        %1205 = vmatprep.subr.mxu0 0.0
        %1206 = vmatpush1.msra.mxu0 0.0
        %1207 = vmatprep.subr.mxu0 0.0
        %1208 = vmatpush1.msra.mxu0 0.0
        %1209 = vmatprep.subr.mxu0 0.0
        %1210 = vmatpush1.msra.mxu0 0.0
        %1211 = vmatprep.subr.mxu0 0.0
        %1212 = vmatpush1.msra.mxu0 0.0
        %1213 = vmatprep.subr.mxu0 0.0
        %1214 = vmatpush1.msra.mxu0 0.0
        %1215 = vmatprep.subr.mxu0 0.0
        %1216 = vmatpush1.msra.mxu0 0.0
        %1217 = vmatprep.subr.mxu0 0.0
        %1218 = vmatpush1.msra.mxu0 0.0
        %1219 = vmatprep.subr.mxu0 0.0
        %1220 = vmatpush1.msra.mxu0 0.0
        %1221 = vmatprep.subr.mxu0 0.0
        %1222 = vmatpush1.msra.mxu0 0.0
        %1223 = vmatprep.subr.mxu0 0.0
        %1224 = vmatpush1.msra.mxu0 0.0
        %1225 = vmatprep.subr.mxu0 0.0
        %1226 = vmatpush1.msra.mxu0 0.0
        %1227 = vmatprep.subr.mxu0 0.0
        %1228 = vmatpush1.msra.mxu0 0.0
        %1229 = vmatprep.subr.mxu0 0.0
        %1230 = vmatpush1.msra.mxu0 0.0
        %1231 = vmatprep.subr.mxu0 0.0
        %1232 = vmatpush1.msra.mxu0 0.0
        %1233 = vmatprep.subr.mxu0 0.0
        %1234 = vmatpush1.msra.mxu0 0.0
        %1235 = vmatprep.subr.mxu0 0.0
        %1236 = vmatpush1.msra.mxu0 0.0
        %1237 = vmatprep.subr.mxu0 0.0
        %1238 = vmatpush1.msra.mxu0 0.0
        %1239 = vmatprep.mubr.f32.mxu0 0.0
        %1240 = vmatmul.mubr.f32.gmra.mrb[0].mxu0 %v1164
        %v1241 = vpop.f32.mrb[0].mxu0
        %v1242 = vadd.f32 %v1145, %v1241
        %v1243 = vpop.f32.mrb[0].mxu0
        %v1244 = vadd.f32 %v1145, %v1243
        %1245 = vmatprep.mubr.f32.mxu0 0.0
        %1246 = vmatmul.mubr.f32.gmra.mrb[0].mxu0 %v1167
        %v1247 = vpop.f32.mrb[0].mxu0
        %v1248 = vadd.f32 %v1150, %v1247
        %v1249 = vpop.f32.mrb[0].mxu0
        %v1250 = vadd.f32 %v1150, %v1249
        %1251 = vmatprep.mubr.f32.mxu0 0.0
        %1252 = vmatmul.mubr.f32.gmra.mrb[0].mxu0 %v1170
        %v1253 = vpop.f32.mrb[0].mxu0
        %v1254 = vadd.f32 %v1155, %v1253
        %v1255 = vpop.f32.mrb[0].mxu0
        %v1256 = vadd.f32 %v1155, %v1255
        %1257 = vmatprep.mubr.f32.mxu0 0.0
        %1258 = vmatmul.mubr.f32.gmra.mrb[0].mxu0 %v1173
        %v1259 = vpop.f32.mrb[0].mxu0
        %v1260 = vadd.f32 %v1160, %v1259
        %v1261 = vpop.f32.mrb[0].mxu0
        %v1262 = vadd.f32 %v1160, %v1261
        %1263 = vdwg.mxu0
        %v1264 = vmax.f32 %v1242, 0.0
        %v1265 = vmax.f32 %v1244, 0.0
        %v1266 = vmax.f32 %v1248, 0.0
        %v1267 = vmax.f32 %v1250, 0.0
        %v1268 = vmax.f32 %v1254, 0.0
        %v1269 = vmax.f32 %v1256, 0.0
        %v1270 = vmax.f32 %v1260, 0.0
        %v1271 = vmax.f32 %v1262, 0.0
        %1272 = vst [vmem:[#allocation4] sm:$0xff] 0.0
        %1273 = vst [vmem:[#allocation4 + $0x8] sm:$0xff] 0.0
        %1274 = vst [vmem:[#allocation4 + $0x10] sm:$0xff] 0.0
        %1275 = vst [vmem:[#allocation4 + $0x18] sm:$0xff] 0.0
        %1276 = vst [vmem:[#allocation4 + $0x20] sm:$0xff] 0.0
        %1277 = vst [vmem:[#allocation4 + $0x28] sm:$0xff] 0.0
        %1278 = vst [vmem:[#allocation4 + $0x30] sm:$0xff] 0.0
        %1279 = vst [vmem:[#allocation4 + $0x38] sm:$0xff] 0.0
        %1280 = vst [vmem:[#allocation4 + $0x40] sm:$0xff] 0.0
        %1281 = vst [vmem:[#allocation4 + $0x48] sm:$0xff] 0.0
        %1282 = vst [vmem:[#allocation4 + $0x50] sm:$0xff] 0.0
        %1283 = vst [vmem:[#allocation4 + $0x58] sm:$0xff] 0.0
        %1284 = vst [vmem:[#allocation4 + $0x60] sm:$0xff] 0.0
        %1285 = vst [vmem:[#allocation4 + $0x68] sm:$0xff] 0.0
        %1286 = vst [vmem:[#allocation4 + $0x70] sm:$0xff] 0.0
        %1287 = vst [vmem:[#allocation4 + $0x78] sm:$0xff] 0.0
        %1288 = vst [vmem:[#allocation4 + $0x8] sm:$0xff] %v1264
        %1289 = vst [vmem:[#allocation4 + $0x10] sm:$0xff] %v1265
        %1290 = vst [vmem:[#allocation4 + $0x28] sm:$0xff] %v1266
        %1291 = vst [vmem:[#allocation4 + $0x30] sm:$0xff] %v1267
        %1292 = vst [vmem:[#allocation4 + $0x48] sm:$0xff] %v1268
        %1293 = vst [vmem:[#allocation4 + $0x50] sm:$0xff] %v1269
        %1294 = vst [vmem:[#allocation4 + $0x68] sm:$0xff] %v1270
        %1295 = vst [vmem:[#allocation4 + $0x70] sm:$0xff] %v1271
        %v1296 = vld [vmem:[#allocation4] sm:$0xff]
        %v1297 = vld [vmem:[#allocation4 + $0x8] sm:$0xff]
        %v1298 = vld [vmem:[#allocation4 + $0x10] sm:$0xff]
        %v1299 = vld [vmem:[#allocation4 + $0x20] sm:$0xff]
        %v1300 = vld [vmem:[#allocation4 + $0x28] sm:$0xff]
        %v1301 = vld [vmem:[#allocation4 + $0x30] sm:$0xff]
        %v1302 = vld [vmem:[#allocation4 + $0x40] sm:$0xff]
        %v1303 = vld [vmem:[#allocation4 + $0x48] sm:$0xff]
        %v1304 = vld [vmem:[#allocation4 + $0x50] sm:$0xff]
        %v1305 = vld [vmem:[#allocation4 + $0x60] sm:$0xff]
        %v1306 = vld [vmem:[#allocation4 + $0x68] sm:$0xff]
        %v1307 = vld [vmem:[#allocation4 + $0x70] sm:$0xff]
        %v1308 = vld [vmem:[%s9] ss:$8 sm:$0x3]
        %v1310 = vlaneseq
        %v1311 = vshrl.u32 %v1310, 7
        %v1312 = vsub.s32 0, %v1311
        %v1313 = vrot.slane %v1308, %v1312
        %v1314 = vlaneseq
        %v1315 = vshrl.u32 %v1314, 7
        %v1316 = vsub.s32 1, %v1315
        %v1317 = vrot.slane %v1308, %v1316
        %1318 = vrot.lane.b32.xlu0 %v1313, 111
        %v1319 = vpop.permute.xlu0 %1318
        %1320 = vrot.lane.b32.xlu0 %v1317, 111
        %v1321 = vpop.permute.xlu0 %1320
        %v1322 = vsel %vm519, %v1319, %v1321
        %v1326 = vmul.f32 %v1296, %v1319
        %v1327 = vmul.f32 %v1297, %v1322
        %v1328 = vmul.f32 %v1298, %v1321
        %v1329 = vmul.f32 %v1299, %v1319
        %v1330 = vmul.f32 %v1300, %v1322
        %v1331 = vmul.f32 %v1301, %v1321
        %v1332 = vmul.f32 %v1302, %v1319
        %v1333 = vmul.f32 %v1303, %v1322
        %v1334 = vmul.f32 %v1304, %v1321
        %v1335 = vmul.f32 %v1305, %v1319
        %v1336 = vmul.f32 %v1306, %v1322
        %v1337 = vmul.f32 %v1307, %v1321
        %1350 = vrot.lane.b32.xlu0 %v1326, 17
        %v1351 = vpop.permute.xlu0 %1350
        %1352 = vrot.lane.b32.xlu0 %v1327, 17
        %v1353 = vpop.permute.xlu0 %1352
        %1354 = vrot.lane.b32.xlu0 %v1328, 17
        %v1355 = vpop.permute.xlu0 %1354
        %1356 = vrot.lane.b32.xlu0 %v1329, 17
        %v1357 = vpop.permute.xlu0 %1356
        %1358 = vrot.lane.b32.xlu0 %v1330, 17
        %v1359 = vpop.permute.xlu0 %1358
        %1360 = vrot.lane.b32.xlu0 %v1331, 17
        %v1361 = vpop.permute.xlu0 %1360
        %1362 = vrot.lane.b32.xlu0 %v1332, 17
        %v1363 = vpop.permute.xlu0 %1362
        %1364 = vrot.lane.b32.xlu0 %v1333, 17
        %v1365 = vpop.permute.xlu0 %1364
        %1366 = vrot.lane.b32.xlu0 %v1334, 17
        %v1367 = vpop.permute.xlu0 %1366
        %1368 = vrot.lane.b32.xlu0 %v1335, 17
        %v1369 = vpop.permute.xlu0 %1368
        %1370 = vrot.lane.b32.xlu0 %v1336, 17
        %v1371 = vpop.permute.xlu0 %1370
        %1372 = vrot.lane.b32.xlu0 %v1337, 17
        %v1373 = vpop.permute.xlu0 %1372
        %v1374 = vsel %vm546, %v1351, %v1353
        %v1375 = vsel %vm546, %v1353, %v1355
        %v1376 = vsel %vm546, %v1357, %v1359
        %v1377 = vsel %vm546, %v1359, %v1361
        %v1378 = vsel %vm546, %v1363, %v1365
        %v1379 = vsel %vm546, %v1365, %v1367
        %v1380 = vsel %vm546, %v1369, %v1371
        %v1381 = vsel %vm546, %v1371, %v1373
        %1390 = vst [vmem:[#allocation5] sm:$0xff] %v1374
        %1391 = vst [vmem:[#allocation5 + $0x8] sm:$0xff] %v1375
        %1392 = vst [vmem:[#allocation5 + $0x10] sm:$0xff] %v1376
        %1393 = vst [vmem:[#allocation5 + $0x18] sm:$0xff] %v1377
        %1394 = vst [vmem:[#allocation5 + $0x20] sm:$0xff] %v1378
        %1395 = vst [vmem:[#allocation5 + $0x28] sm:$0xff] %v1379
        %1396 = vst [vmem:[#allocation5 + $0x30] sm:$0xff] %v1380
        %1397 = vst [vmem:[#allocation5 + $0x38] sm:$0xff] %v1381
        %v1398 = vld [vmem:[#allocation4] sm:$0xff]
        %v1399 = vld [vmem:[#allocation4 + $0x8] sm:$0xff]
        %v1400 = vld [vmem:[#allocation4 + $0x10] sm:$0xff]
        %v1401 = vld [vmem:[#allocation4 + $0x20] sm:$0xff]
        %v1402 = vld [vmem:[#allocation4 + $0x28] sm:$0xff]
        %v1403 = vld [vmem:[#allocation4 + $0x30] sm:$0xff]
        %v1404 = vld [vmem:[#allocation4 + $0x40] sm:$0xff]
        %v1405 = vld [vmem:[#allocation4 + $0x48] sm:$0xff]
        %v1406 = vld [vmem:[#allocation4 + $0x50] sm:$0xff]
        %v1407 = vld [vmem:[#allocation4 + $0x60] sm:$0xff]
        %v1408 = vld [vmem:[#allocation4 + $0x68] sm:$0xff]
        %v1409 = vld [vmem:[#allocation4 + $0x70] sm:$0xff]
        %v1410 = vld [vmem:[%s554] ss:$8 sm:$0x3]
        %v1412 = vlaneseq
        %v1413 = vshrl.u32 %v1412, 7
        %v1414 = vsub.s32 0, %v1413
        %v1415 = vrot.slane %v1410, %v1414
        %v1416 = vlaneseq
        %v1417 = vshrl.u32 %v1416, 7
        %v1418 = vsub.s32 1, %v1417
        %v1419 = vrot.slane %v1410, %v1418
        %1420 = vrot.lane.b32.xlu0 %v1415, 112
        %v1421 = vpop.permute.xlu0 %1420
        %1422 = vrot.lane.b32.xlu0 %v1419, 112
        %v1423 = vpop.permute.xlu0 %1422
        %v1424 = vsel %vm576, %v1421, %v1423
        %v1428 = vmul.f32 %v1398, %v1421
        %v1429 = vmul.f32 %v1399, %v1424
        %v1430 = vmul.f32 %v1400, %v1423
        %v1431 = vmul.f32 %v1401, %v1421
        %v1432 = vmul.f32 %v1402, %v1424
        %v1433 = vmul.f32 %v1403, %v1423
        %v1434 = vmul.f32 %v1404, %v1421
        %v1435 = vmul.f32 %v1405, %v1424
        %v1436 = vmul.f32 %v1406, %v1423
        %v1437 = vmul.f32 %v1407, %v1421
        %v1438 = vmul.f32 %v1408, %v1424
        %v1439 = vmul.f32 %v1409, %v1423
        %1452 = vrot.lane.b32.xlu0 %v1428, 16
        %v1453 = vpop.permute.xlu0 %1452
        %1454 = vrot.lane.b32.xlu0 %v1429, 16
        %v1455 = vpop.permute.xlu0 %1454
        %1456 = vrot.lane.b32.xlu0 %v1430, 16
        %v1457 = vpop.permute.xlu0 %1456
        %1458 = vrot.lane.b32.xlu0 %v1431, 16
        %v1459 = vpop.permute.xlu0 %1458
        %1460 = vrot.lane.b32.xlu0 %v1432, 16
        %v1461 = vpop.permute.xlu0 %1460
        %1462 = vrot.lane.b32.xlu0 %v1433, 16
        %v1463 = vpop.permute.xlu0 %1462
        %1464 = vrot.lane.b32.xlu0 %v1434, 16
        %v1465 = vpop.permute.xlu0 %1464
        %1466 = vrot.lane.b32.xlu0 %v1435, 16
        %v1467 = vpop.permute.xlu0 %1466
        %1468 = vrot.lane.b32.xlu0 %v1436, 16
        %v1469 = vpop.permute.xlu0 %1468
        %1470 = vrot.lane.b32.xlu0 %v1437, 16
        %v1471 = vpop.permute.xlu0 %1470
        %1472 = vrot.lane.b32.xlu0 %v1438, 16
        %v1473 = vpop.permute.xlu0 %1472
        %1474 = vrot.lane.b32.xlu0 %v1439, 16
        %v1475 = vpop.permute.xlu0 %1474
        %v1476 = vsel %vm603, %v1453, %v1455
        %v1477 = vsel %vm603, %v1455, %v1457
        %v1478 = vsel %vm603, %v1459, %v1461
        %v1479 = vsel %vm603, %v1461, %v1463
        %v1480 = vsel %vm603, %v1465, %v1467
        %v1481 = vsel %vm603, %v1467, %v1469
        %v1482 = vsel %vm603, %v1471, %v1473
        %v1483 = vsel %vm603, %v1473, %v1475
        %1492 = vst [vmem:[#allocation5 + $0x40] sm:$0xff] %v1476
        %1493 = vst [vmem:[#allocation5 + $0x48] sm:$0xff] %v1477
        %1494 = vst [vmem:[#allocation5 + $0x50] sm:$0xff] %v1478
        %1495 = vst [vmem:[#allocation5 + $0x58] sm:$0xff] %v1479
        %1496 = vst [vmem:[#allocation5 + $0x60] sm:$0xff] %v1480
        %1497 = vst [vmem:[#allocation5 + $0x68] sm:$0xff] %v1481
        %1498 = vst [vmem:[#allocation5 + $0x70] sm:$0xff] %v1482
        %1499 = vst [vmem:[#allocation5 + $0x78] sm:$0xff] %v1483
        %v1500 = vld [vmem:[#allocation4] sm:$0xff]
        %v1501 = vld [vmem:[#allocation4 + $0x8] sm:$0xff]
        %v1502 = vld [vmem:[#allocation4 + $0x10] sm:$0xff]
        %v1503 = vld [vmem:[#allocation4 + $0x20] sm:$0xff]
        %v1504 = vld [vmem:[#allocation4 + $0x28] sm:$0xff]
        %v1505 = vld [vmem:[#allocation4 + $0x30] sm:$0xff]
        %v1506 = vld [vmem:[#allocation4 + $0x40] sm:$0xff]
        %v1507 = vld [vmem:[#allocation4 + $0x48] sm:$0xff]
        %v1508 = vld [vmem:[#allocation4 + $0x50] sm:$0xff]
        %v1509 = vld [vmem:[#allocation4 + $0x60] sm:$0xff]
        %v1510 = vld [vmem:[#allocation4 + $0x68] sm:$0xff]
        %v1511 = vld [vmem:[#allocation4 + $0x70] sm:$0xff]
        %v1512 = vld [vmem:[%s611] ss:$8 sm:$0x3]
        %v1514 = vlaneseq
        %v1515 = vshrl.u32 %v1514, 7
        %v1516 = vsub.s32 0, %v1515
        %v1517 = vrot.slane %v1512, %v1516
        %v1518 = vlaneseq
        %v1519 = vshrl.u32 %v1518, 7
        %v1520 = vsub.s32 1, %v1519
        %v1521 = vrot.slane %v1512, %v1520
        %1522 = vrot.lane.b32.xlu0 %v1517, 113
        %v1523 = vpop.permute.xlu0 %1522
        %1524 = vrot.lane.b32.xlu0 %v1521, 113
        %v1525 = vpop.permute.xlu0 %1524
        %v1526 = vsel %vm633, %v1523, %v1525
        %v1530 = vmul.f32 %v1500, %v1523
        %v1531 = vmul.f32 %v1501, %v1526
        %v1532 = vmul.f32 %v1502, %v1525
        %v1533 = vmul.f32 %v1503, %v1523
        %v1534 = vmul.f32 %v1504, %v1526
        %v1535 = vmul.f32 %v1505, %v1525
        %v1536 = vmul.f32 %v1506, %v1523
        %v1537 = vmul.f32 %v1507, %v1526
        %v1538 = vmul.f32 %v1508, %v1525
        %v1539 = vmul.f32 %v1509, %v1523
        %v1540 = vmul.f32 %v1510, %v1526
        %v1541 = vmul.f32 %v1511, %v1525
        %1554 = vrot.lane.b32.xlu0 %v1530, 15
        %v1555 = vpop.permute.xlu0 %1554
        %1556 = vrot.lane.b32.xlu0 %v1531, 15
        %v1557 = vpop.permute.xlu0 %1556
        %1558 = vrot.lane.b32.xlu0 %v1532, 15
        %v1559 = vpop.permute.xlu0 %1558
        %1560 = vrot.lane.b32.xlu0 %v1533, 15
        %v1561 = vpop.permute.xlu0 %1560
        %1562 = vrot.lane.b32.xlu0 %v1534, 15
        %v1563 = vpop.permute.xlu0 %1562
        %1564 = vrot.lane.b32.xlu0 %v1535, 15
        %v1565 = vpop.permute.xlu0 %1564
        %1566 = vrot.lane.b32.xlu0 %v1536, 15
        %v1567 = vpop.permute.xlu0 %1566
        %1568 = vrot.lane.b32.xlu0 %v1537, 15
        %v1569 = vpop.permute.xlu0 %1568
        %1570 = vrot.lane.b32.xlu0 %v1538, 15
        %v1571 = vpop.permute.xlu0 %1570
        %1572 = vrot.lane.b32.xlu0 %v1539, 15
        %v1573 = vpop.permute.xlu0 %1572
        %1574 = vrot.lane.b32.xlu0 %v1540, 15
        %v1575 = vpop.permute.xlu0 %1574
        %1576 = vrot.lane.b32.xlu0 %v1541, 15
        %v1577 = vpop.permute.xlu0 %1576
        %v1578 = vsel %vm661, %v1555, %v1557
        %v1579 = vsel %vm661, %v1557, %v1559
        %v1580 = vsel %vm661, %v1561, %v1563
        %v1581 = vsel %vm661, %v1563, %v1565
        %v1582 = vsel %vm661, %v1567, %v1569
        %v1583 = vsel %vm661, %v1569, %v1571
        %v1584 = vsel %vm661, %v1573, %v1575
        %v1585 = vsel %vm661, %v1575, %v1577
        %1594 = vst [vmem:[#allocation5 + $0x80] sm:$0xff] %v1578
        %1595 = vst [vmem:[#allocation5 + $0x88] sm:$0xff] %v1579
        %1596 = vst [vmem:[#allocation5 + $0x90] sm:$0xff] %v1580
        %1597 = vst [vmem:[#allocation5 + $0x98] sm:$0xff] %v1581
        %1598 = vst [vmem:[#allocation5 + $0xa0] sm:$0xff] %v1582
        %1599 = vst [vmem:[#allocation5 + $0xa8] sm:$0xff] %v1583
        %1600 = vst [vmem:[#allocation5 + $0xb0] sm:$0xff] %v1584
        %1601 = vst [vmem:[#allocation5 + $0xb8] sm:$0xff] %v1585
        %v1602 = vld [vmem:[#allocation4] sm:$0xff]
        %v1603 = vld [vmem:[#allocation4 + $0x8] sm:$0xff]
        %v1604 = vld [vmem:[#allocation4 + $0x10] sm:$0xff]
        %v1605 = vld [vmem:[#allocation4 + $0x20] sm:$0xff]
        %v1606 = vld [vmem:[#allocation4 + $0x28] sm:$0xff]
        %v1607 = vld [vmem:[#allocation4 + $0x30] sm:$0xff]
        %v1608 = vld [vmem:[#allocation4 + $0x40] sm:$0xff]
        %v1609 = vld [vmem:[#allocation4 + $0x48] sm:$0xff]
        %v1610 = vld [vmem:[#allocation4 + $0x50] sm:$0xff]
        %v1611 = vld [vmem:[#allocation4 + $0x60] sm:$0xff]
        %v1612 = vld [vmem:[#allocation4 + $0x68] sm:$0xff]
        %v1613 = vld [vmem:[#allocation4 + $0x70] sm:$0xff]
        %v1614 = vld [vmem:[%s669] ss:$8 sm:$0x3]
        %v1616 = vlaneseq
        %v1617 = vshrl.u32 %v1616, 7
        %v1618 = vsub.s32 0, %v1617
        %v1619 = vrot.slane %v1614, %v1618
        %v1620 = vlaneseq
        %v1621 = vshrl.u32 %v1620, 7
        %v1622 = vsub.s32 1, %v1621
        %v1623 = vrot.slane %v1614, %v1622
        %1624 = vrot.lane.b32.xlu0 %v1619, 127
        %v1625 = vpop.permute.xlu0 %1624
        %1626 = vrot.lane.b32.xlu0 %v1623, 127
        %v1627 = vpop.permute.xlu0 %1626
        %v1628 = vsel %vm691, %v1625, %v1627
        %v1632 = vmul.f32 %v1602, %v1625
        %v1633 = vmul.f32 %v1603, %v1628
        %v1634 = vmul.f32 %v1604, %v1627
        %v1635 = vmul.f32 %v1605, %v1625
        %v1636 = vmul.f32 %v1606, %v1628
        %v1637 = vmul.f32 %v1607, %v1627
        %v1638 = vmul.f32 %v1608, %v1625
        %v1639 = vmul.f32 %v1609, %v1628
        %v1640 = vmul.f32 %v1610, %v1627
        %v1641 = vmul.f32 %v1611, %v1625
        %v1642 = vmul.f32 %v1612, %v1628
        %v1643 = vmul.f32 %v1613, %v1627
        %1656 = vrot.lane.b32.xlu0 %v1632, 1
        %v1657 = vpop.permute.xlu0 %1656
        %1658 = vrot.lane.b32.xlu0 %v1633, 1
        %v1659 = vpop.permute.xlu0 %1658
        %1660 = vrot.lane.b32.xlu0 %v1634, 1
        %v1661 = vpop.permute.xlu0 %1660
        %1662 = vrot.lane.b32.xlu0 %v1635, 1
        %v1663 = vpop.permute.xlu0 %1662
        %1664 = vrot.lane.b32.xlu0 %v1636, 1
        %v1665 = vpop.permute.xlu0 %1664
        %1666 = vrot.lane.b32.xlu0 %v1637, 1
        %v1667 = vpop.permute.xlu0 %1666
        %1668 = vrot.lane.b32.xlu0 %v1638, 1
        %v1669 = vpop.permute.xlu0 %1668
        %1670 = vrot.lane.b32.xlu0 %v1639, 1
        %v1671 = vpop.permute.xlu0 %1670
        %1672 = vrot.lane.b32.xlu0 %v1640, 1
        %v1673 = vpop.permute.xlu0 %1672
        %1674 = vrot.lane.b32.xlu0 %v1641, 1
        %v1675 = vpop.permute.xlu0 %1674
        %1676 = vrot.lane.b32.xlu0 %v1642, 1
        %v1677 = vpop.permute.xlu0 %1676
        %1678 = vrot.lane.b32.xlu0 %v1643, 1
        %v1679 = vpop.permute.xlu0 %1678
        %v1680 = vsel %vm719, %v1657, %v1659
        %v1681 = vsel %vm719, %v1659, %v1661
        %v1682 = vsel %vm719, %v1663, %v1665
        %v1683 = vsel %vm719, %v1665, %v1667
        %v1684 = vsel %vm719, %v1669, %v1671
        %v1685 = vsel %vm719, %v1671, %v1673
        %v1686 = vsel %vm719, %v1675, %v1677
        %v1687 = vsel %vm719, %v1677, %v1679
        %1696 = vst [vmem:[#allocation5 + $0xc0] sm:$0xff] %v1680
        %1697 = vst [vmem:[#allocation5 + $0xc8] sm:$0xff] %v1681
        %1698 = vst [vmem:[#allocation5 + $0xd0] sm:$0xff] %v1682
        %1699 = vst [vmem:[#allocation5 + $0xd8] sm:$0xff] %v1683
        %1700 = vst [vmem:[#allocation5 + $0xe0] sm:$0xff] %v1684
        %1701 = vst [vmem:[#allocation5 + $0xe8] sm:$0xff] %v1685
        %1702 = vst [vmem:[#allocation5 + $0xf0] sm:$0xff] %v1686
        %1703 = vst [vmem:[#allocation5 + $0xf8] sm:$0xff] %v1687
        %v1704 = vld [vmem:[#allocation4 + $0x8] sm:$0xff]
        %v1705 = vld [vmem:[#allocation4 + $0x10] sm:$0xff]
        %v1706 = vld [vmem:[#allocation4 + $0x28] sm:$0xff]
        %v1707 = vld [vmem:[#allocation4 + $0x30] sm:$0xff]
        %v1708 = vld [vmem:[#allocation4 + $0x48] sm:$0xff]
        %v1709 = vld [vmem:[#allocation4 + $0x50] sm:$0xff]
        %v1710 = vld [vmem:[#allocation4 + $0x68] sm:$0xff]
        %v1711 = vld [vmem:[#allocation4 + $0x70] sm:$0xff]
        %v1712 = vld [vmem:[%s727] ss:$8 sm:$0x3]
        %v1714 = vlaneseq
        %v1715 = vshrl.u32 %v1714, 7
        %v1716 = vsub.s32 0, %v1715
        %v1717 = vrot.slane %v1712, %v1716
        %v1718 = vlaneseq
        %v1719 = vshrl.u32 %v1718, 7
        %v1720 = vsub.s32 1, %v1719
        %v1721 = vrot.slane %v1712, %v1720
        %v1724 = vmul.f32 %v1704, %v1717
        %v1725 = vmul.f32 %v1705, %v1721
        %v1726 = vmul.f32 %v1706, %v1717
        %v1727 = vmul.f32 %v1707, %v1721
        %v1728 = vmul.f32 %v1708, %v1717
        %v1729 = vmul.f32 %v1709, %v1721
        %v1730 = vmul.f32 %v1710, %v1717
        %v1731 = vmul.f32 %v1711, %v1721
        %1732 = vst [vmem:[#allocation5 + $0x100] sm:$0xff] %v1724
        %1733 = vst [vmem:[#allocation5 + $0x108] sm:$0xff] %v1725
        %1734 = vst [vmem:[#allocation5 + $0x110] sm:$0xff] %v1726
        %1735 = vst [vmem:[#allocation5 + $0x118] sm:$0xff] %v1727
        %1736 = vst [vmem:[#allocation5 + $0x120] sm:$0xff] %v1728
        %1737 = vst [vmem:[#allocation5 + $0x128] sm:$0xff] %v1729
        %1738 = vst [vmem:[#allocation5 + $0x130] sm:$0xff] %v1730
        %1739 = vst [vmem:[#allocation5 + $0x138] sm:$0xff] %v1731
        %v1740 = vld [vmem:[#allocation4 + $0x8] sm:$0xff]
        %v1741 = vld [vmem:[#allocation4 + $0x10] sm:$0xff]
        %v1742 = vld [vmem:[#allocation4 + $0x18] sm:$0xff]
        %v1743 = vld [vmem:[#allocation4 + $0x28] sm:$0xff]
        %v1744 = vld [vmem:[#allocation4 + $0x30] sm:$0xff]
        %v1745 = vld [vmem:[#allocation4 + $0x38] sm:$0xff]
        %v1746 = vld [vmem:[#allocation4 + $0x48] sm:$0xff]
        %v1747 = vld [vmem:[#allocation4 + $0x50] sm:$0xff]
        %v1748 = vld [vmem:[#allocation4 + $0x58] sm:$0xff]
        %v1749 = vld [vmem:[#allocation4 + $0x68] sm:$0xff]
        %v1750 = vld [vmem:[#allocation4 + $0x70] sm:$0xff]
        %v1751 = vld [vmem:[#allocation4 + $0x78] sm:$0xff]
        %v1752 = vld [vmem:[%s762] ss:$8 sm:$0x3]
        %v1754 = vlaneseq
        %v1755 = vshrl.u32 %v1754, 7
        %v1756 = vsub.s32 0, %v1755
        %v1757 = vrot.slane %v1752, %v1756
        %v1758 = vlaneseq
        %v1759 = vshrl.u32 %v1758, 7
        %v1760 = vsub.s32 1, %v1759
        %v1761 = vrot.slane %v1752, %v1760
        %1762 = vrot.lane.b32.xlu0 %v1757, 1
        %v1763 = vpop.permute.xlu0 %1762
        %1764 = vrot.lane.b32.xlu0 %v1761, 1
        %v1765 = vpop.permute.xlu0 %1764
        %v1766 = vsel %vm719, %v1763, %v1765
        %v1770 = vmul.f32 %v1740, %v1763
        %v1771 = vmul.f32 %v1741, %v1766
        %v1772 = vmul.f32 %v1742, %v1765
        %v1773 = vmul.f32 %v1743, %v1763
        %v1774 = vmul.f32 %v1744, %v1766
        %v1775 = vmul.f32 %v1745, %v1765
        %v1776 = vmul.f32 %v1746, %v1763
        %v1777 = vmul.f32 %v1747, %v1766
        %v1778 = vmul.f32 %v1748, %v1765
        %v1779 = vmul.f32 %v1749, %v1763
        %v1780 = vmul.f32 %v1750, %v1766
        %v1781 = vmul.f32 %v1751, %v1765
        %1794 = vrot.lane.b32.xlu0 %v1770, 127
        %v1795 = vpop.permute.xlu0 %1794
        %1796 = vrot.lane.b32.xlu0 %v1771, 127
        %v1797 = vpop.permute.xlu0 %1796
        %1798 = vrot.lane.b32.xlu0 %v1772, 127
        %v1799 = vpop.permute.xlu0 %1798
        %1800 = vrot.lane.b32.xlu0 %v1773, 127
        %v1801 = vpop.permute.xlu0 %1800
        %1802 = vrot.lane.b32.xlu0 %v1774, 127
        %v1803 = vpop.permute.xlu0 %1802
        %1804 = vrot.lane.b32.xlu0 %v1775, 127
        %v1805 = vpop.permute.xlu0 %1804
        %1806 = vrot.lane.b32.xlu0 %v1776, 127
        %v1807 = vpop.permute.xlu0 %1806
        %1808 = vrot.lane.b32.xlu0 %v1777, 127
        %v1809 = vpop.permute.xlu0 %1808
        %1810 = vrot.lane.b32.xlu0 %v1778, 127
        %v1811 = vpop.permute.xlu0 %1810
        %1812 = vrot.lane.b32.xlu0 %v1779, 127
        %v1813 = vpop.permute.xlu0 %1812
        %1814 = vrot.lane.b32.xlu0 %v1780, 127
        %v1815 = vpop.permute.xlu0 %1814
        %1816 = vrot.lane.b32.xlu0 %v1781, 127
        %v1817 = vpop.permute.xlu0 %1816
        %v1818 = vsel %vm691, %v1795, %v1797
        %v1819 = vsel %vm691, %v1797, %v1799
        %v1820 = vsel %vm691, %v1801, %v1803
        %v1821 = vsel %vm691, %v1803, %v1805
        %v1822 = vsel %vm691, %v1807, %v1809
        %v1823 = vsel %vm691, %v1809, %v1811
        %v1824 = vsel %vm691, %v1813, %v1815
        %v1825 = vsel %vm691, %v1815, %v1817
        %1834 = vst [vmem:[#allocation5 + $0x140] sm:$0xff] %v1818
        %1835 = vst [vmem:[#allocation5 + $0x148] sm:$0xff] %v1819
        %1836 = vst [vmem:[#allocation5 + $0x150] sm:$0xff] %v1820
        %1837 = vst [vmem:[#allocation5 + $0x158] sm:$0xff] %v1821
        %1838 = vst [vmem:[#allocation5 + $0x160] sm:$0xff] %v1822
        %1839 = vst [vmem:[#allocation5 + $0x168] sm:$0xff] %v1823
        %1840 = vst [vmem:[#allocation5 + $0x170] sm:$0xff] %v1824
        %1841 = vst [vmem:[#allocation5 + $0x178] sm:$0xff] %v1825
        %v1842 = vld [vmem:[#allocation4 + $0x8] sm:$0xff]
        %v1843 = vld [vmem:[#allocation4 + $0x10] sm:$0xff]
        %v1844 = vld [vmem:[#allocation4 + $0x18] sm:$0xff]
        %v1845 = vld [vmem:[#allocation4 + $0x28] sm:$0xff]
        %v1846 = vld [vmem:[#allocation4 + $0x30] sm:$0xff]
        %v1847 = vld [vmem:[#allocation4 + $0x38] sm:$0xff]
        %v1848 = vld [vmem:[#allocation4 + $0x48] sm:$0xff]
        %v1849 = vld [vmem:[#allocation4 + $0x50] sm:$0xff]
        %v1850 = vld [vmem:[#allocation4 + $0x58] sm:$0xff]
        %v1851 = vld [vmem:[#allocation4 + $0x68] sm:$0xff]
        %v1852 = vld [vmem:[#allocation4 + $0x70] sm:$0xff]
        %v1853 = vld [vmem:[#allocation4 + $0x78] sm:$0xff]
        %v1854 = vld [vmem:[%s817] ss:$8 sm:$0x3]
        %v1856 = vlaneseq
        %v1857 = vshrl.u32 %v1856, 7
        %v1858 = vsub.s32 0, %v1857
        %v1859 = vrot.slane %v1854, %v1858
        %v1860 = vlaneseq
        %v1861 = vshrl.u32 %v1860, 7
        %v1862 = vsub.s32 1, %v1861
        %v1863 = vrot.slane %v1854, %v1862
        %1864 = vrot.lane.b32.xlu0 %v1859, 15
        %v1865 = vpop.permute.xlu0 %1864
        %1866 = vrot.lane.b32.xlu0 %v1863, 15
        %v1867 = vpop.permute.xlu0 %1866
        %v1868 = vsel %vm661, %v1865, %v1867
        %v1872 = vmul.f32 %v1842, %v1865
        %v1873 = vmul.f32 %v1843, %v1868
        %v1874 = vmul.f32 %v1844, %v1867
        %v1875 = vmul.f32 %v1845, %v1865
        %v1876 = vmul.f32 %v1846, %v1868
        %v1877 = vmul.f32 %v1847, %v1867
        %v1878 = vmul.f32 %v1848, %v1865
        %v1879 = vmul.f32 %v1849, %v1868
        %v1880 = vmul.f32 %v1850, %v1867
        %v1881 = vmul.f32 %v1851, %v1865
        %v1882 = vmul.f32 %v1852, %v1868
        %v1883 = vmul.f32 %v1853, %v1867
        %1896 = vrot.lane.b32.xlu0 %v1872, 113
        %v1897 = vpop.permute.xlu0 %1896
        %1898 = vrot.lane.b32.xlu0 %v1873, 113
        %v1899 = vpop.permute.xlu0 %1898
        %1900 = vrot.lane.b32.xlu0 %v1874, 113
        %v1901 = vpop.permute.xlu0 %1900
        %1902 = vrot.lane.b32.xlu0 %v1875, 113
        %v1903 = vpop.permute.xlu0 %1902
        %1904 = vrot.lane.b32.xlu0 %v1876, 113
        %v1905 = vpop.permute.xlu0 %1904
        %1906 = vrot.lane.b32.xlu0 %v1877, 113
        %v1907 = vpop.permute.xlu0 %1906
        %1908 = vrot.lane.b32.xlu0 %v1878, 113
        %v1909 = vpop.permute.xlu0 %1908
        %1910 = vrot.lane.b32.xlu0 %v1879, 113
        %v1911 = vpop.permute.xlu0 %1910
        %1912 = vrot.lane.b32.xlu0 %v1880, 113
        %v1913 = vpop.permute.xlu0 %1912
        %1914 = vrot.lane.b32.xlu0 %v1881, 113
        %v1915 = vpop.permute.xlu0 %1914
        %1916 = vrot.lane.b32.xlu0 %v1882, 113
        %v1917 = vpop.permute.xlu0 %1916
        %1918 = vrot.lane.b32.xlu0 %v1883, 113
        %v1919 = vpop.permute.xlu0 %1918
        %v1920 = vsel %vm633, %v1897, %v1899
        %v1921 = vsel %vm633, %v1899, %v1901
        %v1922 = vsel %vm633, %v1903, %v1905
        %v1923 = vsel %vm633, %v1905, %v1907
        %v1924 = vsel %vm633, %v1909, %v1911
        %v1925 = vsel %vm633, %v1911, %v1913
        %v1926 = vsel %vm633, %v1915, %v1917
        %v1927 = vsel %vm633, %v1917, %v1919
        %1936 = vst [vmem:[#allocation5 + $0x180] sm:$0xff] %v1920
        %1937 = vst [vmem:[#allocation5 + $0x188] sm:$0xff] %v1921
        %1938 = vst [vmem:[#allocation5 + $0x190] sm:$0xff] %v1922
        %1939 = vst [vmem:[#allocation5 + $0x198] sm:$0xff] %v1923
        %1940 = vst [vmem:[#allocation5 + $0x1a0] sm:$0xff] %v1924
        %1941 = vst [vmem:[#allocation5 + $0x1a8] sm:$0xff] %v1925
        %1942 = vst [vmem:[#allocation5 + $0x1b0] sm:$0xff] %v1926
        %1943 = vst [vmem:[#allocation5 + $0x1b8] sm:$0xff] %v1927
        %v1944 = vld [vmem:[#allocation4 + $0x8] sm:$0xff]
        %v1945 = vld [vmem:[#allocation4 + $0x10] sm:$0xff]
        %v1946 = vld [vmem:[#allocation4 + $0x18] sm:$0xff]
        %v1947 = vld [vmem:[#allocation4 + $0x28] sm:$0xff]
        %v1948 = vld [vmem:[#allocation4 + $0x30] sm:$0xff]
        %v1949 = vld [vmem:[#allocation4 + $0x38] sm:$0xff]
        %v1950 = vld [vmem:[#allocation4 + $0x48] sm:$0xff]
        %v1951 = vld [vmem:[#allocation4 + $0x50] sm:$0xff]
        %v1952 = vld [vmem:[#allocation4 + $0x58] sm:$0xff]
        %v1953 = vld [vmem:[#allocation4 + $0x68] sm:$0xff]
        %v1954 = vld [vmem:[#allocation4 + $0x70] sm:$0xff]
        %v1955 = vld [vmem:[#allocation4 + $0x78] sm:$0xff]
        %v1956 = vld [vmem:[%s873] ss:$8 sm:$0x3]
        %v1958 = vlaneseq
        %v1959 = vshrl.u32 %v1958, 7
        %v1960 = vsub.s32 0, %v1959
        %v1961 = vrot.slane %v1956, %v1960
        %v1962 = vlaneseq
        %v1963 = vshrl.u32 %v1962, 7
        %v1964 = vsub.s32 1, %v1963
        %v1965 = vrot.slane %v1956, %v1964
        %1966 = vrot.lane.b32.xlu0 %v1961, 16
        %v1967 = vpop.permute.xlu0 %1966
        %1968 = vrot.lane.b32.xlu0 %v1965, 16
        %v1969 = vpop.permute.xlu0 %1968
        %v1970 = vsel %vm603, %v1967, %v1969
        %v1974 = vmul.f32 %v1944, %v1967
        %v1975 = vmul.f32 %v1945, %v1970
        %v1976 = vmul.f32 %v1946, %v1969
        %v1977 = vmul.f32 %v1947, %v1967
        %v1978 = vmul.f32 %v1948, %v1970
        %v1979 = vmul.f32 %v1949, %v1969
        %v1980 = vmul.f32 %v1950, %v1967
        %v1981 = vmul.f32 %v1951, %v1970
        %v1982 = vmul.f32 %v1952, %v1969
        %v1983 = vmul.f32 %v1953, %v1967
        %v1984 = vmul.f32 %v1954, %v1970
        %v1985 = vmul.f32 %v1955, %v1969
        %1998 = vrot.lane.b32.xlu0 %v1974, 112
        %v1999 = vpop.permute.xlu0 %1998
        %2000 = vrot.lane.b32.xlu0 %v1975, 112
        %v2001 = vpop.permute.xlu0 %2000
        %2002 = vrot.lane.b32.xlu0 %v1976, 112
        %v2003 = vpop.permute.xlu0 %2002
        %2004 = vrot.lane.b32.xlu0 %v1977, 112
        %v2005 = vpop.permute.xlu0 %2004
        %2006 = vrot.lane.b32.xlu0 %v1978, 112
        %v2007 = vpop.permute.xlu0 %2006
        %2008 = vrot.lane.b32.xlu0 %v1979, 112
        %v2009 = vpop.permute.xlu0 %2008
        %2010 = vrot.lane.b32.xlu0 %v1980, 112
        %v2011 = vpop.permute.xlu0 %2010
        %2012 = vrot.lane.b32.xlu0 %v1981, 112
        %v2013 = vpop.permute.xlu0 %2012
        %2014 = vrot.lane.b32.xlu0 %v1982, 112
        %v2015 = vpop.permute.xlu0 %2014
        %2016 = vrot.lane.b32.xlu0 %v1983, 112
        %v2017 = vpop.permute.xlu0 %2016
        %2018 = vrot.lane.b32.xlu0 %v1984, 112
        %v2019 = vpop.permute.xlu0 %2018
        %2020 = vrot.lane.b32.xlu0 %v1985, 112
        %v2021 = vpop.permute.xlu0 %2020
        %v2022 = vsel %vm576, %v1999, %v2001
        %v2023 = vsel %vm576, %v2001, %v2003
        %v2024 = vsel %vm576, %v2005, %v2007
        %v2025 = vsel %vm576, %v2007, %v2009
        %v2026 = vsel %vm576, %v2011, %v2013
        %v2027 = vsel %vm576, %v2013, %v2015
        %v2028 = vsel %vm576, %v2017, %v2019
        %v2029 = vsel %vm576, %v2019, %v2021
        %2038 = vst [vmem:[#allocation5 + $0x1c0] sm:$0xff] %v2022
        %2039 = vst [vmem:[#allocation5 + $0x1c8] sm:$0xff] %v2023
        %2040 = vst [vmem:[#allocation5 + $0x1d0] sm:$0xff] %v2024
        %2041 = vst [vmem:[#allocation5 + $0x1d8] sm:$0xff] %v2025
        %2042 = vst [vmem:[#allocation5 + $0x1e0] sm:$0xff] %v2026
        %2043 = vst [vmem:[#allocation5 + $0x1e8] sm:$0xff] %v2027
        %2044 = vst [vmem:[#allocation5 + $0x1f0] sm:$0xff] %v2028
        %2045 = vst [vmem:[#allocation5 + $0x1f8] sm:$0xff] %v2029
        %v2046 = vld [vmem:[#allocation4 + $0x8] sm:$0xff]
        %v2047 = vld [vmem:[#allocation4 + $0x10] sm:$0xff]
        %v2048 = vld [vmem:[#allocation4 + $0x18] sm:$0xff]
        %v2049 = vld [vmem:[#allocation4 + $0x28] sm:$0xff]
        %v2050 = vld [vmem:[#allocation4 + $0x30] sm:$0xff]
        %v2051 = vld [vmem:[#allocation4 + $0x38] sm:$0xff]
        %v2052 = vld [vmem:[#allocation4 + $0x48] sm:$0xff]
        %v2053 = vld [vmem:[#allocation4 + $0x50] sm:$0xff]
        %v2054 = vld [vmem:[#allocation4 + $0x58] sm:$0xff]
        %v2055 = vld [vmem:[#allocation4 + $0x68] sm:$0xff]
        %v2056 = vld [vmem:[#allocation4 + $0x70] sm:$0xff]
        %v2057 = vld [vmem:[#allocation4 + $0x78] sm:$0xff]
        %v2058 = vld [vmem:[%s929] ss:$8 sm:$0x3]
        %v2060 = vlaneseq
        %v2061 = vshrl.u32 %v2060, 7
        %v2062 = vsub.s32 0, %v2061
        %v2063 = vrot.slane %v2058, %v2062
        %v2064 = vlaneseq
        %v2065 = vshrl.u32 %v2064, 7
        %v2066 = vsub.s32 1, %v2065
        %v2067 = vrot.slane %v2058, %v2066
        %2068 = vrot.lane.b32.xlu0 %v2063, 17
        %v2069 = vpop.permute.xlu0 %2068
        %2070 = vrot.lane.b32.xlu0 %v2067, 17
        %v2071 = vpop.permute.xlu0 %2070
        %v2072 = vsel %vm546, %v2069, %v2071
        %v2076 = vmul.f32 %v2046, %v2069
        %v2077 = vmul.f32 %v2047, %v2072
        %v2078 = vmul.f32 %v2048, %v2071
        %v2079 = vmul.f32 %v2049, %v2069
        %v2080 = vmul.f32 %v2050, %v2072
        %v2081 = vmul.f32 %v2051, %v2071
        %v2082 = vmul.f32 %v2052, %v2069
        %v2083 = vmul.f32 %v2053, %v2072
        %v2084 = vmul.f32 %v2054, %v2071
        %v2085 = vmul.f32 %v2055, %v2069
        %v2086 = vmul.f32 %v2056, %v2072
        %v2087 = vmul.f32 %v2057, %v2071
        %2100 = vrot.lane.b32.xlu0 %v2076, 111
        %v2101 = vpop.permute.xlu0 %2100
        %2102 = vrot.lane.b32.xlu0 %v2077, 111
        %v2103 = vpop.permute.xlu0 %2102
        %2104 = vrot.lane.b32.xlu0 %v2078, 111
        %v2105 = vpop.permute.xlu0 %2104
        %2106 = vrot.lane.b32.xlu0 %v2079, 111
        %v2107 = vpop.permute.xlu0 %2106
        %2108 = vrot.lane.b32.xlu0 %v2080, 111
        %v2109 = vpop.permute.xlu0 %2108
        %2110 = vrot.lane.b32.xlu0 %v2081, 111
        %v2111 = vpop.permute.xlu0 %2110
        %2112 = vrot.lane.b32.xlu0 %v2082, 111
        %v2113 = vpop.permute.xlu0 %2112
        %2114 = vrot.lane.b32.xlu0 %v2083, 111
        %v2115 = vpop.permute.xlu0 %2114
        %2116 = vrot.lane.b32.xlu0 %v2084, 111
        %v2117 = vpop.permute.xlu0 %2116
        %2118 = vrot.lane.b32.xlu0 %v2085, 111
        %v2119 = vpop.permute.xlu0 %2118
        %2120 = vrot.lane.b32.xlu0 %v2086, 111
        %v2121 = vpop.permute.xlu0 %2120
        %2122 = vrot.lane.b32.xlu0 %v2087, 111
        %v2123 = vpop.permute.xlu0 %2122
        %v2124 = vsel %vm519, %v2101, %v2103
        %v2125 = vsel %vm519, %v2103, %v2105
        %v2126 = vsel %vm519, %v2107, %v2109
        %v2127 = vsel %vm519, %v2109, %v2111
        %v2128 = vsel %vm519, %v2113, %v2115
        %v2129 = vsel %vm519, %v2115, %v2117
        %v2130 = vsel %vm519, %v2119, %v2121
        %v2131 = vsel %vm519, %v2121, %v2123
        %2140 = vst [vmem:[#allocation5 + $0x200] sm:$0xff] %v2124
        %2141 = vst [vmem:[#allocation5 + $0x208] sm:$0xff] %v2125
        %2142 = vst [vmem:[#allocation5 + $0x210] sm:$0xff] %v2126
        %2143 = vst [vmem:[#allocation5 + $0x218] sm:$0xff] %v2127
        %2144 = vst [vmem:[#allocation5 + $0x220] sm:$0xff] %v2128
        %2145 = vst [vmem:[#allocation5 + $0x228] sm:$0xff] %v2129
        %2146 = vst [vmem:[#allocation5 + $0x230] sm:$0xff] %v2130
        %2147 = vst [vmem:[#allocation5 + $0x238] sm:$0xff] %v2131
        %v2148 = vld [vmem:[%s7] sm:$0xff]
        %v2149 = vld [vmem:[%s7 + $0x8] sm:$0xf]
        %v2150 = vld [vmem:[#allocation5] sm:$0xff]
        %v2151 = vld [vmem:[#allocation5 + $0x8] sm:$0xff]
        %v2152 = vld [vmem:[#allocation5 + $0x10] sm:$0xff]
        %v2153 = vld [vmem:[#allocation5 + $0x18] sm:$0xff]
        %v2154 = vld [vmem:[#allocation5 + $0x20] sm:$0xff]
        %v2155 = vld [vmem:[#allocation5 + $0x28] sm:$0xff]
        %v2156 = vld [vmem:[#allocation5 + $0x30] sm:$0xff]
        %v2157 = vld [vmem:[#allocation5 + $0x38] sm:$0xff]
        %v2158 = vld [vmem:[#allocation5 + $0x40] sm:$0xff]
        %v2159 = vld [vmem:[#allocation5 + $0x48] sm:$0xff]
        %v2160 = vld [vmem:[#allocation5 + $0x50] sm:$0xff]
        %v2161 = vld [vmem:[#allocation5 + $0x58] sm:$0xff]
        %v2162 = vld [vmem:[#allocation5 + $0x60] sm:$0xff]
        %v2163 = vld [vmem:[#allocation5 + $0x68] sm:$0xff]
        %v2164 = vld [vmem:[#allocation5 + $0x70] sm:$0xff]
        %v2165 = vld [vmem:[#allocation5 + $0x78] sm:$0xff]
        %v2166 = vld [vmem:[#allocation5 + $0x80] sm:$0xff]
        %v2167 = vld [vmem:[#allocation5 + $0x88] sm:$0xff]
        %v2168 = vld [vmem:[#allocation5 + $0x90] sm:$0xff]
        %v2169 = vld [vmem:[#allocation5 + $0x98] sm:$0xff]
        %v2170 = vld [vmem:[#allocation5 + $0xa0] sm:$0xff]
        %v2171 = vld [vmem:[#allocation5 + $0xa8] sm:$0xff]
        %v2172 = vld [vmem:[#allocation5 + $0xb0] sm:$0xff]
        %v2173 = vld [vmem:[#allocation5 + $0xb8] sm:$0xff]
        %v2174 = vld [vmem:[#allocation5 + $0xc0] sm:$0xff]
        %v2175 = vld [vmem:[#allocation5 + $0xc8] sm:$0xff]
        %v2176 = vld [vmem:[#allocation5 + $0xd0] sm:$0xff]
        %v2177 = vld [vmem:[#allocation5 + $0xd8] sm:$0xff]
        %v2178 = vld [vmem:[#allocation5 + $0xe0] sm:$0xff]
        %v2179 = vld [vmem:[#allocation5 + $0xe8] sm:$0xff]
        %v2180 = vld [vmem:[#allocation5 + $0xf0] sm:$0xff]
        %v2181 = vld [vmem:[#allocation5 + $0xf8] sm:$0xff]
        %v2182 = vld [vmem:[#allocation5 + $0x100] sm:$0xff]
        %v2183 = vld [vmem:[#allocation5 + $0x108] sm:$0xff]
        %v2184 = vld [vmem:[#allocation5 + $0x110] sm:$0xff]
        %v2185 = vld [vmem:[#allocation5 + $0x118] sm:$0xff]
        %v2186 = vld [vmem:[#allocation5 + $0x120] sm:$0xff]
        %v2187 = vld [vmem:[#allocation5 + $0x128] sm:$0xff]
        %v2188 = vld [vmem:[#allocation5 + $0x130] sm:$0xff]
        %v2189 = vld [vmem:[#allocation5 + $0x138] sm:$0xff]
        %v2190 = vld [vmem:[#allocation5 + $0x140] sm:$0xff]
        %v2191 = vld [vmem:[#allocation5 + $0x148] sm:$0xff]
        %v2192 = vld [vmem:[#allocation5 + $0x150] sm:$0xff]
        %v2193 = vld [vmem:[#allocation5 + $0x158] sm:$0xff]
        %v2194 = vld [vmem:[#allocation5 + $0x160] sm:$0xff]
        %v2195 = vld [vmem:[#allocation5 + $0x168] sm:$0xff]
        %v2196 = vld [vmem:[#allocation5 + $0x170] sm:$0xff]
        %v2197 = vld [vmem:[#allocation5 + $0x178] sm:$0xff]
        %v2198 = vld [vmem:[#allocation5 + $0x180] sm:$0xff]
        %v2199 = vld [vmem:[#allocation5 + $0x188] sm:$0xff]
        %v2200 = vld [vmem:[#allocation5 + $0x190] sm:$0xff]
        %v2201 = vld [vmem:[#allocation5 + $0x198] sm:$0xff]
        %v2202 = vld [vmem:[#allocation5 + $0x1a0] sm:$0xff]
        %v2203 = vld [vmem:[#allocation5 + $0x1a8] sm:$0xff]
        %v2204 = vld [vmem:[#allocation5 + $0x1b0] sm:$0xff]
        %v2205 = vld [vmem:[#allocation5 + $0x1b8] sm:$0xff]
        %v2206 = vld [vmem:[#allocation5 + $0x1c0] sm:$0xff]
        %v2207 = vld [vmem:[#allocation5 + $0x1c8] sm:$0xff]
        %v2208 = vld [vmem:[#allocation5 + $0x1d0] sm:$0xff]
        %v2209 = vld [vmem:[#allocation5 + $0x1d8] sm:$0xff]
        %v2210 = vld [vmem:[#allocation5 + $0x1e0] sm:$0xff]
        %v2211 = vld [vmem:[#allocation5 + $0x1e8] sm:$0xff]
        %v2212 = vld [vmem:[#allocation5 + $0x1f0] sm:$0xff]
        %v2213 = vld [vmem:[#allocation5 + $0x1f8] sm:$0xff]
        %v2214 = vld [vmem:[#allocation5 + $0x200] sm:$0xff]
        %v2215 = vld [vmem:[#allocation5 + $0x208] sm:$0xff]
        %v2216 = vld [vmem:[#allocation5 + $0x210] sm:$0xff]
        %v2217 = vld [vmem:[#allocation5 + $0x218] sm:$0xff]
        %v2218 = vld [vmem:[#allocation5 + $0x220] sm:$0xff]
        %v2219 = vld [vmem:[#allocation5 + $0x228] sm:$0xff]
        %v2220 = vld [vmem:[#allocation5 + $0x230] sm:$0xff]
        %v2221 = vld [vmem:[#allocation5 + $0x238] sm:$0xff]
        %v2222 = vld [vmem:[%s8] sm:$0xf]
        %2224 = vset.pattern.permute.xlu0 0
        %2225 = vperm.xlu0 %2224, %v2222
        %v2226 = vpop.permute.xlu0 %2225
        %v2230 = vcombine.high %v2148, %v2148
        %v2232 = vsel %vm1162, %v2149, 0
        %2234 = vmatprep.subr.mxu0 %v2151
        %2235 = vmatpush1.msra.mxu0 %v2150
        %2236 = vmatprep.subr.mxu0 %v2153
        %2237 = vmatpush1.msra.mxu0 %v2152
        %2238 = vmatprep.subr.mxu0 %v2155
        %2239 = vmatpush1.msra.mxu0 %v2154
        %2240 = vmatprep.subr.mxu0 %v2157
        %2241 = vmatpush1.msra.mxu0 %v2156
        %2242 = vmatprep.subr.mxu0 %v2159
        %2243 = vmatpush1.msra.mxu0 %v2158
        %2244 = vmatprep.subr.mxu0 %v2161
        %2245 = vmatpush1.msra.mxu0 %v2160
        %2246 = vmatprep.subr.mxu0 %v2163
        %2247 = vmatpush1.msra.mxu0 %v2162
        %2248 = vmatprep.subr.mxu0 %v2165
        %2249 = vmatpush1.msra.mxu0 %v2164
        %2250 = vmatprep.subr.mxu0 %v2167
        %2251 = vmatpush1.msra.mxu0 %v2166
        %2252 = vmatprep.subr.mxu0 %v2169
        %2253 = vmatpush1.msra.mxu0 %v2168
        %2254 = vmatprep.subr.mxu0 %v2171
        %2255 = vmatpush1.msra.mxu0 %v2170
        %2256 = vmatprep.subr.mxu0 %v2173
        %2257 = vmatpush1.msra.mxu0 %v2172
        %2258 = vmatprep.subr.mxu0 %v2175
        %2259 = vmatpush1.msra.mxu0 %v2174
        %2260 = vmatprep.subr.mxu0 %v2177
        %2261 = vmatpush1.msra.mxu0 %v2176
        %2262 = vmatprep.subr.mxu0 %v2179
        %2263 = vmatpush1.msra.mxu0 %v2178
        %2264 = vmatprep.subr.mxu0 %v2181
        %2265 = vmatpush1.msra.mxu0 %v2180
        %2266 = vmatprep.subr.mxu0 %v2183
        %2267 = vmatpush1.msra.mxu0 %v2182
        %2268 = vmatprep.subr.mxu0 %v2185
        %2269 = vmatpush1.msra.mxu0 %v2184
        %2270 = vmatprep.subr.mxu0 %v2187
        %2271 = vmatpush1.msra.mxu0 %v2186
        %2272 = vmatprep.subr.mxu0 %v2189
        %2273 = vmatpush1.msra.mxu0 %v2188
        %2274 = vmatprep.subr.mxu0 %v2191
        %2275 = vmatpush1.msra.mxu0 %v2190
        %2276 = vmatprep.subr.mxu0 %v2193
        %2277 = vmatpush1.msra.mxu0 %v2192
        %2278 = vmatprep.subr.mxu0 %v2195
        %2279 = vmatpush1.msra.mxu0 %v2194
        %2280 = vmatprep.subr.mxu0 %v2197
        %2281 = vmatpush1.msra.mxu0 %v2196
        %2282 = vmatprep.subr.mxu0 %v2199
        %2283 = vmatpush1.msra.mxu0 %v2198
        %2284 = vmatprep.subr.mxu0 %v2201
        %2285 = vmatpush1.msra.mxu0 %v2200
        %2286 = vmatprep.subr.mxu0 %v2203
        %2287 = vmatpush1.msra.mxu0 %v2202
        %2288 = vmatprep.subr.mxu0 %v2205
        %2289 = vmatpush1.msra.mxu0 %v2204
        %2290 = vmatprep.subr.mxu0 %v2207
        %2291 = vmatpush1.msra.mxu0 %v2206
        %2292 = vmatprep.subr.mxu0 %v2209
        %2293 = vmatpush1.msra.mxu0 %v2208
        %2294 = vmatprep.subr.mxu0 %v2211
        %2295 = vmatpush1.msra.mxu0 %v2210
        %2296 = vmatprep.subr.mxu0 %v2213
        %2297 = vmatpush1.msra.mxu0 %v2212
        %2298 = vmatprep.mubr.f32.mxu0 %v2230
        %2299 = vmatmul.mubr.f32.gmra.mrb[0].mxu0 %v2148
        %v2300 = vpop.f32.mrb[0].mxu0
        %v2301 = vadd.f32 %v2226, %v2300
        %v2302 = vpop.f32.mrb[0].mxu0
        %v2303 = vadd.f32 %v2226, %v2302
        %2304 = vdwg.mxu0
        %2305 = vmatprep.subr.mxu0 %v2215
        %2306 = vmatpush1.msra.mxu0 %v2214
        %2307 = vmatprep.subr.mxu0 %v2217
        %2308 = vmatpush1.msra.mxu0 %v2216
        %2309 = vmatprep.subr.mxu0 %v2219
        %2310 = vmatpush1.msra.mxu0 %v2218
        %2311 = vmatprep.subr.mxu0 %v2221
        %2312 = vmatpush1.msra.mxu0 %v2220
        %2313 = vmatprep.subr.mxu0 0.0
        %2314 = vmatpush1.msra.mxu0 0.0
        %2315 = vmatprep.subr.mxu0 0.0
        %2316 = vmatpush1.msra.mxu0 0.0
        %2317 = vmatprep.subr.mxu0 0.0
        %2318 = vmatpush1.msra.mxu0 0.0
        %2319 = vmatprep.subr.mxu0 0.0
        %2320 = vmatpush1.msra.mxu0 0.0
        %2321 = vmatprep.subr.mxu0 0.0
        %2322 = vmatpush1.msra.mxu0 0.0
        %2323 = vmatprep.subr.mxu0 0.0
        %2324 = vmatpush1.msra.mxu0 0.0
        %2325 = vmatprep.subr.mxu0 0.0
        %2326 = vmatpush1.msra.mxu0 0.0
        %2327 = vmatprep.subr.mxu0 0.0
        %2328 = vmatpush1.msra.mxu0 0.0
        %2329 = vmatprep.subr.mxu0 0.0
        %2330 = vmatpush1.msra.mxu0 0.0
        %2331 = vmatprep.subr.mxu0 0.0
        %2332 = vmatpush1.msra.mxu0 0.0
        %2333 = vmatprep.subr.mxu0 0.0
        %2334 = vmatpush1.msra.mxu0 0.0
        %2335 = vmatprep.subr.mxu0 0.0
        %2336 = vmatpush1.msra.mxu0 0.0
        %2337 = vmatprep.subr.mxu0 0.0
        %2338 = vmatpush1.msra.mxu0 0.0
        %2339 = vmatprep.subr.mxu0 0.0
        %2340 = vmatpush1.msra.mxu0 0.0
        %2341 = vmatprep.subr.mxu0 0.0
        %2342 = vmatpush1.msra.mxu0 0.0
        %2343 = vmatprep.subr.mxu0 0.0
        %2344 = vmatpush1.msra.mxu0 0.0
        %2345 = vmatprep.subr.mxu0 0.0
        %2346 = vmatpush1.msra.mxu0 0.0
        %2347 = vmatprep.subr.mxu0 0.0
        %2348 = vmatpush1.msra.mxu0 0.0
        %2349 = vmatprep.subr.mxu0 0.0
        %2350 = vmatpush1.msra.mxu0 0.0
        %2351 = vmatprep.subr.mxu0 0.0
        %2352 = vmatpush1.msra.mxu0 0.0
        %2353 = vmatprep.subr.mxu0 0.0
        %2354 = vmatpush1.msra.mxu0 0.0
        %2355 = vmatprep.subr.mxu0 0.0
        %2356 = vmatpush1.msra.mxu0 0.0
        %2357 = vmatprep.subr.mxu0 0.0
        %2358 = vmatpush1.msra.mxu0 0.0
        %2359 = vmatprep.subr.mxu0 0.0
        %2360 = vmatpush1.msra.mxu0 0.0
        %2361 = vmatprep.subr.mxu0 0.0
        %2362 = vmatpush1.msra.mxu0 0.0
        %2363 = vmatprep.subr.mxu0 0.0
        %2364 = vmatpush1.msra.mxu0 0.0
        %2365 = vmatprep.subr.mxu0 0.0
        %2366 = vmatpush1.msra.mxu0 0.0
        %2367 = vmatprep.subr.mxu0 0.0
        %2368 = vmatpush1.msra.mxu0 0.0
        %2369 = vmatprep.mubr.f32.mxu0 0.0
        %2370 = vmatmul.mubr.f32.gmra.mrb[0].mxu0 %v2232
        %v2371 = vpop.f32.mrb[0].mxu0
        %v2372 = vadd.f32 %v2301, %v2371
        %v2373 = vpop.f32.mrb[0].mxu0
        %v2374 = vadd.f32 %v2303, %v2373
        %2375 = vdwg.mxu0
        %v2376 = vadd.f32 %v2372, 2.0
        %v2377 = vadd.f32 %v2374, 2.0
        %v2378 = vand.u32 2147483647, %v2376
        %v2379 = vand.u32 2147483647, %v2377
        %v2380 = vsub.f32 0.0, %v2378
        %v2381 = vsub.f32 0.0, %v2379
        %v2382 = vmul.f32 %v2380, 1.442695
        %v2383 = vpow.pop %v2382
        %v2384 = vmul.f32 %v2381, 1.442695
        %v2385 = vpow.pop %v2384
        %v2386 = vadd.f32 %v2383, 1.0
        %v2387 = vadd.f32 %v2385, 1.0
        %v2388 = vrcp.pop %v2386
        %v2389 = vmul.f32 1.0, %v2388
        %v2390 = vrcp.pop %v2387
        %v2391 = vmul.f32 1.0, %v2390
        %vm2392 = vcmp.ge.f32.partialorder %v2376, 0.0
        %vm2393 = vcmp.ge.f32.partialorder %v2377, 0.0
        %v2394 = vmul.f32 %v2383, %v2389
        %v2395 = vmul.f32 %v2385, %v2391
        %v2396 = vsel %vm2392, %v2389, %v2394
        %v2397 = vsel %vm2393, %v2391, %v2395
        %v2398 = vmin.f32 %v2376, 0.0
        %v2399 = vmin.f32 %v2377, 0.0
        %v2400 = vlog2.pop %v2386
        %v2401 = vmul.f32 %v2400, 0.6931472
        %v2402 = vlog2.pop %v2387
        %v2403 = vmul.f32 %v2402, 0.6931472
        %v2404 = vsub.f32 %v2398, %v2401
        %v2405 = vsub.f32 %v2399, %v2403
        %2407 = vst [vmem:[%s380] sm:$0x33] %v487
        %v2408 = vmul.f32 %v480, %v2396
        %v2409 = vmul.f32 %v482, %v2397
        %v2412 = vrot.slane %v2372, 6
        %v2413 = vrot.slane %v2374, 6
        %v2416 = vadd.f32 %v2408, %v2412
        %v2417 = vadd.f32 %v2409, %v2413
        %v2420 = vcombine.low %v2416, %v2417
        %2422 = vst [vmem:[%s380] sm:$0xcc] %v2420
        %vm2423 = vcmask 1043458
        %v2424 = vsel %vm2423, %v2404, 0.0
        %v2425 = vsel %vm2423, %v2405, 0.0
        %v2426 = vadd.f32 %v2424, %v2425
        %2427 = vadd.xlane.f32.xlu0 %v2426
        %v2428 = vpop.xlane.xlu0 %2427
        %v2430 = vrot.slane %v2428, 2
        %v2432 = vsel %vm1030, %v2430, 0.0
        %v2433 = vrot.slane %v2432, 4
        %v2434 = vadd.f32 %v2432, %v2433
        %v2435 = vrot.slane %v2434, 2
        %v2436 = vadd.f32 %v2434, %v2435
        %v2437 = vrot.slane %v2436, 1
        %v2438 = vadd.f32 %v2436, %v2437
        %vm2439 = vcmask 0
        %2440 = vst.msk [vmem:[%s393] sm:$0x1] %vm2439, %v2438
        %s2441 = sand.u32 %s249, 1
        %s2442 = scalar_lea.sflag [#allocation7], %s2441
        %s2443 = sand.u32 %s249, 1
        %s2444 = smul.addr %s2443, 8
        %s2445 = scalar_lea.vmem [#allocation6], %s2444
        %p2446 = scmp.lt.s32.totalorder %s26, 1
        %s2447 = scalar_select %p2446, %s26, 1
        %s2448 = scalar_lea.vmem %s11, %s2447
        // Predicated region
        $region61: #{tpu_custom_call.1} parent=59 // pred_check
          %p2449 = pneg %p259
        $region62: #{tpu_custom_call.1} parent=59 // pred_check_branch
          %2451 = sbr.rel (%p2449) target = $region64
        $region63: #{tpu_custom_call.1} parent=59 // pred_region
          %s2453 = ssub.s32 128, 128
          %2454 = vsyncadd %s2442, %s2453
          %s2455 = smul.addr %s26, 2
          %s2456 = smul.addr %s2455, 64
          %s2457 = scalar_lea.hbm %s10, %s2456
          %s2459 = sshll.u32 %s2445, 4
          %s2460 = int_to_ptr.vmem [resolvable:$true] %s2459
          %2462 = dma.vmem_to_hbm [thread:$0]  %s2460, 128, %s2457, %s2442
        $region64: #{tpu_custom_call.1} parent=59 // pred_fallthru
          _
        // Predicated region
        $region65: #{tpu_custom_call.1} parent=59 // pred_check
          %p2463 = pneg %p285
        $region66: #{tpu_custom_call.1} parent=59 // pred_check_branch
          %2465 = sbr.rel (%p2463) target = $region68
        $region67: #{tpu_custom_call.1} parent=59 // pred_region
          _
        $region68: #{tpu_custom_call.1} parent=59 // pred_fallthru
          _
      $region60: #{tpu_custom_call.1} parent=5 // pred_fallthru
        _
      %p2466 = scmp.le.s32.totalorder 2, %s21
      // Predicated region
      $region69: #{tpu_custom_call.1} parent=5 // pred_check
        %p2467 = pneg %p2466
      $region70: #{tpu_custom_call.1} parent=5 // pred_check_branch
        %2469 = sbr.rel (%p2467) target = $region72
      $region71: #{tpu_custom_call.1} parent=5 // pred_region
        %s2470 = ssub.s32 %s21, 2
        // Predicated region
        $region73: #{tpu_custom_call.1} parent=71 // pred_check
          %p2471 = pneg %p265
        $region74: #{tpu_custom_call.1} parent=71 // pred_check_branch
          %2473 = sbr.rel (%p2471) target = $region76
        $region75: #{tpu_custom_call.1} parent=71 // pred_region
          %s2474 = sand.u32 %s250, 1
          %s2475 = scalar_lea.sflag [#allocation7], %s2474
          %s2476 = sand.u32 %s250, 1
          %s2477 = smul.addr %s2476, 8
          %s2478 = scalar_lea.vmem [#allocation6], %s2477
          %2479 = dma.done %s2475, 128
        $region76: #{tpu_custom_call.1} parent=71 // pred_fallthru
          _
        // Predicated region
        $region77: #{tpu_custom_call.1} parent=71 // pred_check
          %p2480 = pneg %p291
        $region78: #{tpu_custom_call.1} parent=71 // pred_check_branch
          %2482 = sbr.rel (%p2480) target = $region80
        $region79: #{tpu_custom_call.1} parent=71 // pred_region
          %p2483 = scmp.lt.s32.totalorder %s27, 1
          %s2484 = scalar_select %p2483, %s27, 1
          %s2485 = scalar_lea.vmem %s11, %s2484
        $region80: #{tpu_custom_call.1} parent=71 // pred_fallthru
          _
      $region72: #{tpu_custom_call.1} parent=5 // pred_fallthru
        _
    $region6: #{tpu_custom_call.1} parent=1 // loop_footer
      %s25 = sadd.s32 1, %s21
    $region7: #{tpu_custom_call.1} parent=1 // loop_footer_branch
      %20 = sbr.rel target = $region3
    $region8: #{tpu_custom_call.1} parent=1 // loop_exit
      _
    %2486 = vsyncpa [#allocation7], 1
    %s2487 = scalar_lea.sflag [#allocation7], 1
    %2488 = vsyncpa %s2487, 1

</llo_original>
